<compile_context>
chip_gen: v6e
topology: v6e:2x2x1
jax: 0.10.0
libtpu: 0.0.40
codegen_flags: <defaults>
</compile_context>

<pallas_src>
import functools
import math

import jax
import jax.numpy as jnp
from jax.experimental import pallas as pl
from jax.experimental.pallas import tpu as pltpu

_CH_ALIGN = 16  # bf16 sublane tile -> all slab stores are full, tile-aligned


def _round_up(n, m):
    return ((n + m - 1) // m) * m


def _pick_block_b(B):
    """Largest divisor of B that keeps the grid length >= 2 (both v7x TCs)."""
    if B <= 2:
        return 1
    best = 1
    for bt in range(1, B // 2 + 1):
        if B % bt == 0:
            best = bt
    return best


# ----------------------------------------------------------------------------
# Fused kernel: conv1 + bias + ReLU + eval-mode BN + conv2 + bias + ReLU
# ----------------------------------------------------------------------------
def _diff_kernel(x_ref, w1_ref, b1_ref, scale_ref, shift_ref, w2_ref, b2_ref,
                 mask_ref, o_ref, slab1_ref, y1_ref, slab2_ref,
                 *, H, W, LH, RH, Lp, block_b):
    """Processes `block_b` images per grid step.

    x_ref     : (block_b, Cin_p, P) bf16   flattened zero-padded input,
                                           P = (H+3)*(W+2), channels padded
    w1_ref    : (Cmid_p, 9*Cin_p)   bf16   conv1 weights, K = tap*Cin_p + c
    b1_ref    : (Cmid_p, 1)         f32    conv1 bias
    scale_ref : (Cmid_p, 1)         f32    BN scale = gamma / sqrt(var + eps)
    shift_ref : (Cmid_p, 1)         f32    BN shift = beta - scale * mean
    w2_ref    : (Cout, 9*Cmid_p)    bf16   conv2 weights, K = tap*Cmid_p + c
    b2_ref    : (Cout, 1)           f32    conv2 bias
    mask_ref  : (1, L)              f32    zeroes the 2 row-wrap cols per row
    o_ref     : (block_b, Cout, Lp) f32    lane-dense flattened output
                                           (cols >= L junk, sliced by wrapper)
    slab1_ref : (9*Cin_p, L)        bf16   scratch: stacked conv1 tap slices
    y1_ref    : (Cmid_p, LH+L+RH)   bf16   scratch: zero-haloed conv1/BN output
    slab2_ref : (9*Cmid_p, Lp)      bf16   scratch: stacked conv2 tap slices
    """
    Wp = W + 2
    L = H * Wp
    Cin_p = x_ref.shape[1]
    Cmid_p = y1_ref.shape[0]

    # Resident operands, hoisted out of the per-image loop.
    w1 = w1_ref[...]
    w2 = w2_ref[...]
    b1 = b1_ref[...]
    b2 = b2_ref[...]
    scale = scale_ref[...]
    shift = shift_ref[...]
    mask = mask_ref[...]

    # Zero only the two halo strips (cheap, lane-aligned); the interior is
    # fully overwritten for every image.  Done every grid step (not just step
    # 0) so the kernel stays correct when the "parallel" batch axis is split
    # across two TensorCores, each with its own scratch.
    y1_ref[:, :LH] = jnp.zeros((Cmid_p, LH), jnp.bfloat16)
    y1_ref[:, LH + L:] = jnp.zeros((Cmid_p, RH), jnp.bfloat16)

    for b in range(block_b):                      # static unroll, block_b small
        x = x_ref[b]                              # (Cin_p, P) bf16

        # ---- conv1: 9 taps folded into K -> single MXU matmul --------------
        # (tile-aligned full-block stores: Cin_p is a multiple of 16)
        for ky in range(3):
            for kx in range(3):
                t = ky * 3 + kx
                off = ky * Wp + kx
                slab1_ref[t * Cin_p:(t + 1) * Cin_p, :] = x[:, off:off + L]
        acc1 = jnp.dot(w1, slab1_ref[...],
                       preferred_element_type=jnp.float32)     # (Cmid_p, L) f32

        # bias + ReLU + exact eval-mode BatchNorm; the mask then re-zeroes the
        # 2 row-wrap columns per row so conv2 sees true zero padding (this is
        # what makes the border handling exact -- no BN fold into conv2).
        y1 = jnp.maximum(acc1 + b1, 0.0)
        y1 = (y1 * scale + shift) * mask

        # interior of the zero-haloed buffer (lane-aligned store at LH)
        y1_ref[:, LH:LH + L] = y1.astype(jnp.bfloat16)
        yp = y1_ref[...]                          # (Cmid_p, LH+L+RH) bf16

        # ---- conv2: 9 taps folded into K, N padded to lane-dense Lp --------
        # TODO(synk): the 9 unaligned shifted reads per conv could be reduced
        # with pltpu.roll row-band loads (XLU) at larger sizes.
        base = LH - (Wp + 1)
        for ky in range(3):
            for kx in range(3):
                t = ky * 3 + kx
                off = base + ky * Wp + kx
                slab2_ref[t * Cmid_p:(t + 1) * Cmid_p, :] = yp[:, off:off + Lp]
        acc2 = jnp.dot(w2, slab2_ref[...],
                       preferred_element_type=jnp.float32)     # (Cout, Lp) f32
        o_ref[b] = jnp.maximum(acc2 + b2, 0.0)


# ----------------------------------------------------------------------------
# Wrapper
# ----------------------------------------------------------------------------
def diff_forward(params, x, *, block_b=None):
    """x: (B, Cin, H, W) f32 -> (B, Cout, H, W) f32."""
    B, Cin, H, W = x.shape
    w1, b1 = params["w1"], params["b1"]
    w2, b2 = params["w2"], params["b2"]
    scale, shift = params["bn_scale"], params["bn_shift"]
    Cmid_p = w1.shape[0]
    Cin_p = w1.shape[1] // 9
    Cout = w2.shape[0]
    assert Cin_p >= Cin and w2.shape[1] == 9 * Cmid_p

    Wp = W + 2
    P = (H + 3) * Wp              # 1 top + 2 bottom pad rows, 1 + 1 col pads
    L = H * Wp                    # flattened conv-output length per image
    Lp = _round_up(L, 128)        # lane-dense padded output length
    LH = _round_up(Wp + 1, 128)   # left halo >= max left reach of conv2 taps
    RH = _round_up((Lp - L) + Wp + 1, 128)   # right halo covers padded columns
    assert LH >= Wp + 1 and RH >= (Lp - L) + Wp + 1

    if block_b is None:
        block_b = _pick_block_b(B)
    assert B % block_b == 0
    grid = (B // block_b,)

    # One pad op (channel pad to the bf16 tile + spatial zero pad) + contiguous
    # reshape; bf16 halves the HBM bytes of the only large input.
    # TODO(synk): at production H*W, build the padded bf16 layout inside the
    # kernel (DMA rows into a zeroed VMEM buffer) and tile the flattened
    # spatial axis across the grid (size tiles per generation: ~half on v7x's
    # 64 MiB VMEM vs v5e/v6e, raise vmem_limit_bytes accordingly).
    x_pad = jnp.pad(x, ((0, 0), (0, Cin_p - Cin), (1, 2), (1, 1)))
    x_flat = x_pad.reshape(B, Cin_p, P).astype(jnp.bfloat16)

    # Mask for the 2 junk (row-wrap) columns per flattened output row.
    col = jax.lax.broadcasted_iota(jnp.int32, (H, Wp), 1)
    mask = (col < W).astype(jnp.float32).reshape(1, L)

    out_flat = pl.pallas_call(
        functools.partial(_diff_kernel, H=H, W=W, LH=LH, RH=RH, Lp=Lp,
                          block_b=block_b),
        out_shape=jax.ShapeDtypeStruct((B, Cout, Lp), jnp.float32),
        grid_spec=pltpu.PrefetchScalarGridSpec(
            num_scalar_prefetch=0,
            grid=grid,
            in_specs=[
                pl.BlockSpec((block_b, Cin_p, P), lambda i: (i, 0, 0)),
                # Weights / BN params / mask: constant block index -> fetched
                # once, stay resident in VMEM across the whole batch grid.
                pl.BlockSpec((Cmid_p, 9 * Cin_p), lambda i: (0, 0)),
                pl.BlockSpec((Cmid_p, 1), lambda i: (0, 0)),
                pl.BlockSpec((Cmid_p, 1), lambda i: (0, 0)),
                pl.BlockSpec((Cmid_p, 1), lambda i: (0, 0)),
                pl.BlockSpec((Cout, 9 * Cmid_p), lambda i: (0, 0)),
                pl.BlockSpec((Cout, 1), lambda i: (0, 0)),
                pl.BlockSpec((1, L), lambda i: (0, 0)),
            ],
            out_specs=pl.BlockSpec((block_b, Cout, Lp), lambda i: (i, 0, 0)),
            scratch_shapes=[
                pltpu.VMEM((9 * Cin_p, L), jnp.bfloat16),         # conv1 slab
                pltpu.VMEM((Cmid_p, LH + L + RH), jnp.bfloat16),  # haloed y1
                pltpu.VMEM((9 * Cmid_p, Lp), jnp.bfloat16),       # conv2 slab
            ],
        ),
        compiler_params=pltpu.CompilerParams(
            dimension_semantics=("parallel",),
        ),
    )(x_flat, w1, b1, scale, shift, w2, b2, mask)

    # Drop the lane padding / row-wrap columns and restore NCHW.
    return out_flat[:, :, :L].reshape(B, Cout, H, Wp)[:, :, :, :W]


# ----------------------------------------------------------------------------
# Parameter init (deterministic).  BN kept as exact per-channel scale/shift.
# ----------------------------------------------------------------------------
def init_diff_params(key, in_channels, out_channels, eps=1e-5):
    ks = jax.random.split(key, 8)
    w1 = jax.random.normal(ks[0], (out_channels, in_channels, 3, 3),
                           jnp.float32) / math.sqrt(in_channels * 9)
    b1 = 0.05 * jax.random.normal(ks[1], (out_channels,), jnp.float32)
    w2 = jax.random.normal(ks[2], (out_channels, out_channels, 3, 3),
                           jnp.float32) / math.sqrt(out_channels * 9)
    b2 = 0.05 * jax.random.normal(ks[3], (out_channels,), jnp.float32)
    gamma = 1.0 + 0.1 * jax.random.normal(ks[4], (out_channels,), jnp.float32)
    beta = 0.1 * jax.random.normal(ks[5], (out_channels,), jnp.float32)
    mean = 0.1 * jax.random.normal(ks[6], (out_channels,), jnp.float32)
    var = jax.random.uniform(ks[7], (out_channels,), jnp.float32, 0.5, 1.5)

    # TODO(synk): BatchNorm uses inference-mode running statistics; training-
    # mode batch statistics are not implemented.
    scale = gamma / jnp.sqrt(var + eps)            # (Cmid,)
    shift = beta - scale * mean                    # (Cmid,)

    cin_p = _round_up(in_channels, _CH_ALIGN)
    cmid_p = _round_up(out_channels, _CH_ALIGN)

    def pack_taps(w, o_pad, i_pad):
        # (O, I, 3, 3) -> (o_pad, 9*i_pad) bf16, K index = (ky*3+kx)*i_pad + i
        O, I = w.shape[0], w.shape[1]
        wt = jnp.transpose(w, (0, 2, 3, 1))                     # (O, ky, kx, I)
        wt = jnp.pad(wt, ((0, o_pad - O), (0, 0), (0, 0), (0, i_pad - I)))
        return wt.reshape(o_pad, 9 * i_pad).astype(jnp.bfloat16)

    def pad_rows(v, n):
        return jnp.pad(v.reshape(-1, 1), ((0, n - v.shape[0]), (0, 0)))

    params = {
        "w1": pack_taps(w1, cmid_p, cin_p),            # (Cmid_p, 9*Cin_p)
        "b1": pad_rows(b1, cmid_p),
        "bn_scale": pad_rows(scale, cmid_p),
        "bn_shift": pad_rows(shift, cmid_p),
        "w2": pack_taps(w2, out_channels, cmid_p),     # (Cout, 9*Cmid_p)
        "b2": b2.reshape(-1, 1),
    }
    raw = dict(w1=w1, b1=b1, w2=w2, b2=b2, gamma=gamma, beta=beta,
               mean=mean, var=var, eps=eps)
    return params, raw


# ----------------------------------------------------------------------------
# Pure-JAX f32 reference (un-fused) for the correctness check
# ----------------------------------------------------------------------------
def diff_reference(raw, x):
    def conv(z, w, b):
        y = jax.lax.conv_general_dilated(
            z, w, (1, 1), ((1, 1), (1, 1)),
            dimension_numbers=("NCHW", "OIHW", "NCHW"))
        return y + b[None, :, None, None]

    y = jnp.maximum(conv(x, raw["w1"], raw["b1"]), 0.0)
    y = (y - raw["mean"][None, :, None, None]) / jnp.sqrt(
        raw["var"] + raw["eps"])[None, :, None, None]
    y = y * raw["gamma"][None, :, None, None] + raw["beta"][None, :, None, None]
    y = jnp.maximum(conv(y, raw["w2"], raw["b2"]), 0.0)
    return y


# ----------------------------------------------------------------------------
if __name__ == "__main__":
    B, CIN, COUT, H, W = 2, 4, 8, 16, 16
    key = jax.random.PRNGKey(0)
    k_x, k_p = jax.random.split(key)
    x = jax.random.normal(k_x, (B, CIN, H, W), jnp.float32)
    params, raw = init_diff_params(k_p, CIN, COUT)

    fwd = jax.jit(diff_forward)
    out = fwd(params, x)
    jax.block_until_ready(out)

    assert out.shape == (B, COUT, H, W), out.shape
    assert bool(jnp.all(jnp.isfinite(out)))

    ref = diff_reference(raw, x)
    max_err = float(jnp.max(jnp.abs(out - ref)))
    mean_err = float(jnp.mean(jnp.abs(out - ref)))
    # Remaining error is pure bf16 rounding: BN (incl. borders) is now exact.
    assert max_err < 0.1, f"max abs err vs f32 reference: {max_err}"
    assert mean_err < 0.01, f"mean abs err vs f32 reference: {mean_err}"
    print("KERNEL_OK")
</pallas_src>

<mosaic_0001>
module attributes {stable_mosaic.version = 11 : i64} {
  func.func @_diff_kernel(%arg0: i32, %arg1: memref<1x16x342xbf16, #tpu.memory_space<vmem>>, %arg2: memref<16x144xbf16, #tpu.memory_space<vmem>>, %arg3: memref<16x1xf32, #tpu.memory_space<vmem>>, %arg4: memref<16x1xf32, #tpu.memory_space<vmem>>, %arg5: memref<16x1xf32, #tpu.memory_space<vmem>>, %arg6: memref<8x144xbf16, #tpu.memory_space<vmem>>, %arg7: memref<8x1xf32, #tpu.memory_space<vmem>>, %arg8: memref<1x288xf32, #tpu.memory_space<vmem>>, %arg9: memref<1x8x384xf32, #tpu.memory_space<vmem>>, %arg10: memref<144x288xbf16, #tpu.memory_space<vmem>>, %arg11: memref<16x544xbf16, #tpu.memory_space<vmem>>, %arg12: memref<144x384xbf16, #tpu.memory_space<vmem>>) attributes {dimension_semantics = [#tpu.dimension_semantics<parallel>], iteration_bounds = array<i64: 2>, scalar_prefetch = 0 : i64, scratch_operands = 3 : i64, tpu.core_type = #tpu.core_type<tc>, window_params = [{transform_indices = @transform_0, window_bounds = array<i64: 1, 16, 342>}, {pipeline_mode = #tpu.pipeline_mode<synchronous>, transform_indices = @transform_1, window_bounds = array<i64: 16, 144>}, {pipeline_mode = #tpu.pipeline_mode<synchronous>, transform_indices = @transform_2, window_bounds = array<i64: 16, 1>}, {pipeline_mode = #tpu.pipeline_mode<synchronous>, transform_indices = @transform_3, window_bounds = array<i64: 16, 1>}, {pipeline_mode = #tpu.pipeline_mode<synchronous>, transform_indices = @transform_4, window_bounds = array<i64: 16, 1>}, {pipeline_mode = #tpu.pipeline_mode<synchronous>, transform_indices = @transform_5, window_bounds = array<i64: 8, 144>}, {pipeline_mode = #tpu.pipeline_mode<synchronous>, transform_indices = @transform_6, window_bounds = array<i64: 8, 1>}, {pipeline_mode = #tpu.pipeline_mode<synchronous>, transform_indices = @transform_7, window_bounds = array<i64: 1, 288>}, {transform_indices = @transform_8, window_bounds = array<i64: 1, 8, 384>}]} {
    %c0 = arith.constant 0 : index
    %c0_0 = arith.constant 0 : index
    %0 = vector.load %arg2[%c0, %c0_0] : memref<16x144xbf16, #tpu.memory_space<vmem>>, vector<16x144xbf16>
    %c0_1 = arith.constant 0 : index
    %c0_2 = arith.constant 0 : index
    %1 = vector.load %arg6[%c0_1, %c0_2] : memref<8x144xbf16, #tpu.memory_space<vmem>>, vector<8x144xbf16>
    %c0_3 = arith.constant 0 : index
    %c0_4 = arith.constant 0 : index
    %2 = vector.load %arg3[%c0_3, %c0_4] : memref<16x1xf32, #tpu.memory_space<vmem>>, vector<16x1xf32>
    %c0_5 = arith.constant 0 : index
    %c0_6 = arith.constant 0 : index
    %3 = vector.load %arg7[%c0_5, %c0_6] : memref<8x1xf32, #tpu.memory_space<vmem>>, vector<8x1xf32>
    %c0_7 = arith.constant 0 : index
    %c0_8 = arith.constant 0 : index
    %4 = vector.load %arg4[%c0_7, %c0_8] : memref<16x1xf32, #tpu.memory_space<vmem>>, vector<16x1xf32>
    %c0_9 = arith.constant 0 : index
    %c0_10 = arith.constant 0 : index
    %5 = vector.load %arg5[%c0_9, %c0_10] : memref<16x1xf32, #tpu.memory_space<vmem>>, vector<16x1xf32>
    %c0_11 = arith.constant 0 : index
    %c0_12 = arith.constant 0 : index
    %6 = vector.load %arg8[%c0_11, %c0_12] : memref<1x288xf32, #tpu.memory_space<vmem>>, vector<1x288xf32>
    %cst = arith.constant 0.000000e+00 : bf16
    %7 = vector.broadcast %cst : bf16 to vector<16x128xbf16>
    %c0_13 = arith.constant 0 : index
    %c0_14 = arith.constant 0 : index
    %8 = vector.load %arg11[%c0_13, %c0_14] : memref<16x544xbf16, #tpu.memory_space<vmem>>, vector<16x128xbf16>
    tpu.vector_store %arg11[%c0_13, %c0_14], %7 {strides = array<i32>} : memref<16x544xbf16, #tpu.memory_space<vmem>>, vector<16x128xbf16>,
    %cst_15 = arith.constant 0.000000e+00 : bf16
    %9 = vector.broadcast %cst_15 : bf16 to vector<16x128xbf16>
    %c0_16 = arith.constant 0 : index
    %c416 = arith.constant 416 : index
    %10 = vector.load %arg11[%c0_16, %c416] : memref<16x544xbf16, #tpu.memory_space<vmem>>, vector<16x128xbf16>
    tpu.vector_store %arg11[%c0_16, %c416], %9 {strides = array<i32>} : memref<16x544xbf16, #tpu.memory_space<vmem>>, vector<16x128xbf16>,
    %c0_17 = arith.constant 0 : index
    %c0_18 = arith.constant 0 : index
    %c0_19 = arith.constant 0 : index
    %11 = vector.load %arg1[%c0_17, %c0_18, %c0_19] : memref<1x16x342xbf16, #tpu.memory_space<vmem>>, vector<1x16x342xbf16>
    %12 = vector.shape_cast %11 : vector<1x16x342xbf16> to vector<16x342xbf16>
    %13 = vector.extract_strided_slice %12 {offsets = [0, 0], sizes = [16, 288], strides = [1, 1]} : vector<16x342xbf16> to vector<16x288xbf16>
    %c0_20 = arith.constant 0 : index
    %c0_21 = arith.constant 0 : index
    %14 = vector.load %arg10[%c0_20, %c0_21] : memref<144x288xbf16, #tpu.memory_space<vmem>>, vector<16x288xbf16>
    tpu.vector_store %arg10[%c0_20, %c0_21], %13 {strides = array<i32>} : memref<144x288xbf16, #tpu.memory_space<vmem>>, vector<16x288xbf16>,
    %15 = vector.extract_strided_slice %12 {offsets = [0, 1], sizes = [16, 288], strides = [1, 1]} : vector<16x342xbf16> to vector<16x288xbf16>
    %c16 = arith.constant 16 : index
    %c0_22 = arith.constant 0 : index
    %16 = vector.load %arg10[%c16, %c0_22] : memref<144x288xbf16, #tpu.memory_space<vmem>>, vector<16x288xbf16>
    tpu.vector_store %arg10[%c16, %c0_22], %15 {strides = array<i32>} : memref<144x288xbf16, #tpu.memory_space<vmem>>, vector<16x288xbf16>,
    %17 = vector.extract_strided_slice %12 {offsets = [0, 2], sizes = [16, 288], strides = [1, 1]} : vector<16x342xbf16> to vector<16x288xbf16>
    %c32 = arith.constant 32 : index
    %c0_23 = arith.constant 0 : index
    %18 = vector.load %arg10[%c32, %c0_23] : memref<144x288xbf16, #tpu.memory_space<vmem>>, vector<16x288xbf16>
    tpu.vector_store %arg10[%c32, %c0_23], %17 {strides = array<i32>} : memref<144x288xbf16, #tpu.memory_space<vmem>>, vector<16x288xbf16>,
    %19 = vector.extract_strided_slice %12 {offsets = [0, 18], sizes = [16, 288], strides = [1, 1]} : vector<16x342xbf16> to vector<16x288xbf16>
    %c48 = arith.constant 48 : index
    %c0_24 = arith.constant 0 : index
    %20 = vector.load %arg10[%c48, %c0_24] : memref<144x288xbf16, #tpu.memory_space<vmem>>, vector<16x288xbf16>
    tpu.vector_store %arg10[%c48, %c0_24], %19 {strides = array<i32>} : memref<144x288xbf16, #tpu.memory_space<vmem>>, vector<16x288xbf16>,
    %21 = vector.extract_strided_slice %12 {offsets = [0, 19], sizes = [16, 288], strides = [1, 1]} : vector<16x342xbf16> to vector<16x288xbf16>
    %c64 = arith.constant 64 : index
    %c0_25 = arith.constant 0 : index
    %22 = vector.load %arg10[%c64, %c0_25] : memref<144x288xbf16, #tpu.memory_space<vmem>>, vector<16x288xbf16>
    tpu.vector_store %arg10[%c64, %c0_25], %21 {strides = array<i32>} : memref<144x288xbf16, #tpu.memory_space<vmem>>, vector<16x288xbf16>,
    %23 = vector.extract_strided_slice %12 {offsets = [0, 20], sizes = [16, 288], strides = [1, 1]} : vector<16x342xbf16> to vector<16x288xbf16>
    %c80 = arith.constant 80 : index
    %c0_26 = arith.constant 0 : index
    %24 = vector.load %arg10[%c80, %c0_26] : memref<144x288xbf16, #tpu.memory_space<vmem>>, vector<16x288xbf16>
    tpu.vector_store %arg10[%c80, %c0_26], %23 {strides = array<i32>} : memref<144x288xbf16, #tpu.memory_space<vmem>>, vector<16x288xbf16>,
    %25 = vector.extract_strided_slice %12 {offsets = [0, 36], sizes = [16, 288], strides = [1, 1]} : vector<16x342xbf16> to vector<16x288xbf16>
    %c96 = arith.constant 96 : index
    %c0_27 = arith.constant 0 : index
    %26 = vector.load %arg10[%c96, %c0_27] : memref<144x288xbf16, #tpu.memory_space<vmem>>, vector<16x288xbf16>
    tpu.vector_store %arg10[%c96, %c0_27], %25 {strides = array<i32>} : memref<144x288xbf16, #tpu.memory_space<vmem>>, vector<16x288xbf16>,
    %27 = vector.extract_strided_slice %12 {offsets = [0, 37], sizes = [16, 288], strides = [1, 1]} : vector<16x342xbf16> to vector<16x288xbf16>
    %c112 = arith.constant 112 : index
    %c0_28 = arith.constant 0 : index
    %28 = vector.load %arg10[%c112, %c0_28] : memref<144x288xbf16, #tpu.memory_space<vmem>>, vector<16x288xbf16>
    tpu.vector_store %arg10[%c112, %c0_28], %27 {strides = array<i32>} : memref<144x288xbf16, #tpu.memory_space<vmem>>, vector<16x288xbf16>,
    %29 = vector.extract_strided_slice %12 {offsets = [0, 38], sizes = [16, 288], strides = [1, 1]} : vector<16x342xbf16> to vector<16x288xbf16>
    %c128 = arith.constant 128 : index
    %c0_29 = arith.constant 0 : index
    %30 = vector.load %arg10[%c128, %c0_29] : memref<144x288xbf16, #tpu.memory_space<vmem>>, vector<16x288xbf16>
    tpu.vector_store %arg10[%c128, %c0_29], %29 {strides = array<i32>} : memref<144x288xbf16, #tpu.memory_space<vmem>>, vector<16x288xbf16>,
    %c0_30 = arith.constant 0 : index
    %c0_31 = arith.constant 0 : index
    %31 = vector.load %arg10[%c0_30, %c0_31] : memref<144x288xbf16, #tpu.memory_space<vmem>>, vector<144x288xbf16>
    %cst_32 = arith.constant dense<0.000000e+00> : vector<16x288xf32>
    %32 = tpu.matmul %0, %31, %cst_32 {dimension_numbers = #tpu.dot_dimension_numbers<[1], [0], [0], [1], [0, 0, 1, 1], [], []>} : vector<16x144xbf16>, vector<144x288xbf16>, vector<16x288xf32> -> vector<16x288xf32>
    %33 = vector.broadcast %2 : vector<16x1xf32> to vector<16x288xf32>
    %34 = arith.addf %32, %33 : vector<16x288xf32>
    %cst_33 = arith.constant 0.000000e+00 : f32
    %35 = vector.broadcast %cst_33 : f32 to vector<16x288xf32>
    %36 = arith.maximumf %34, %35 : vector<16x288xf32>
    %37 = vector.broadcast %4 : vector<16x1xf32> to vector<16x288xf32>
    %38 = arith.mulf %36, %37 : vector<16x288xf32>
    %39 = vector.broadcast %5 : vector<16x1xf32> to vector<16x288xf32>
    %40 = arith.addf %38, %39 : vector<16x288xf32>
    %41 = vector.broadcast %6 : vector<1x288xf32> to vector<16x288xf32>
    %42 = arith.mulf %40, %41 : vector<16x288xf32>
    %43 = arith.truncf %42 : vector<16x288xf32> to vector<16x288xbf16>
    %c0_34 = arith.constant 0 : index
    %c128_35 = arith.constant 128 : index
    %44 = vector.load %arg11[%c0_34, %c128_35] : memref<16x544xbf16, #tpu.memory_space<vmem>>, vector<16x288xbf16>
    tpu.vector_store %arg11[%c0_34, %c128_35], %43 {strides = array<i32>} : memref<16x544xbf16, #tpu.memory_space<vmem>>, vector<16x288xbf16>,
    %c0_36 = arith.constant 0 : index
    %c0_37 = arith.constant 0 : index
    %45 = vector.load %arg11[%c0_36, %c0_37] : memref<16x544xbf16, #tpu.memory_space<vmem>>, vector<16x544xbf16>
    %46 = vector.extract_strided_slice %45 {offsets = [0, 109], sizes = [16, 384], strides = [1, 1]} : vector<16x544xbf16> to vector<16x384xbf16>
    %c0_38 = arith.constant 0 : index
    %c0_39 = arith.constant 0 : index
    %47 = vector.load %arg12[%c0_38, %c0_39] : memref<144x384xbf16, #tpu.memory_space<vmem>>, vector<16x384xbf16>
    tpu.vector_store %arg12[%c0_38, %c0_39], %46 {strides = array<i32>} : memref<144x384xbf16, #tpu.memory_space<vmem>>, vector<16x384xbf16>,
    %48 = vector.extract_strided_slice %45 {offsets = [0, 110], sizes = [16, 384], strides = [1, 1]} : vector<16x544xbf16> to vector<16x384xbf16>
    %c16_40 = arith.constant 16 : index
    %c0_41 = arith.constant 0 : index
    %49 = vector.load %arg12[%c16_40, %c0_41] : memref<144x384xbf16, #tpu.memory_space<vmem>>, vector<16x384xbf16>
    tpu.vector_store %arg12[%c16_40, %c0_41], %48 {strides = array<i32>} : memref<144x384xbf16, #tpu.memory_space<vmem>>, vector<16x384xbf16>,
    %50 = vector.extract_strided_slice %45 {offsets = [0, 111], sizes = [16, 384], strides = [1, 1]} : vector<16x544xbf16> to vector<16x384xbf16>
    %c32_42 = arith.constant 32 : index
    %c0_43 = arith.constant 0 : index
    %51 = vector.load %arg12[%c32_42, %c0_43] : memref<144x384xbf16, #tpu.memory_space<vmem>>, vector<16x384xbf16>
    tpu.vector_store %arg12[%c32_42, %c0_43], %50 {strides = array<i32>} : memref<144x384xbf16, #tpu.memory_space<vmem>>, vector<16x384xbf16>,
    %52 = vector.extract_strided_slice %45 {offsets = [0, 127], sizes = [16, 384], strides = [1, 1]} : vector<16x544xbf16> to vector<16x384xbf16>
    %c48_44 = arith.constant 48 : index
    %c0_45 = arith.constant 0 : index
    %53 = vector.load %arg12[%c48_44, %c0_45] : memref<144x384xbf16, #tpu.memory_space<vmem>>, vector<16x384xbf16>
    tpu.vector_store %arg12[%c48_44, %c0_45], %52 {strides = array<i32>} : memref<144x384xbf16, #tpu.memory_space<vmem>>, vector<16x384xbf16>,
    %54 = vector.extract_strided_slice %45 {offsets = [0, 128], sizes = [16, 384], strides = [1, 1]} : vector<16x544xbf16> to vector<16x384xbf16>
    %c64_46 = arith.constant 64 : index
    %c0_47 = arith.constant 0 : index
    %55 = vector.load %arg12[%c64_46, %c0_47] : memref<144x384xbf16, #tpu.memory_space<vmem>>, vector<16x384xbf16>
    tpu.vector_store %arg12[%c64_46, %c0_47], %54 {strides = array<i32>} : memref<144x384xbf16, #tpu.memory_space<vmem>>, vector<16x384xbf16>,
    %56 = vector.extract_strided_slice %45 {offsets = [0, 129], sizes = [16, 384], strides = [1, 1]} : vector<16x544xbf16> to vector<16x384xbf16>
    %c80_48 = arith.constant 80 : index
    %c0_49 = arith.constant 0 : index
    %57 = vector.load %arg12[%c80_48, %c0_49] : memref<144x384xbf16, #tpu.memory_space<vmem>>, vector<16x384xbf16>
    tpu.vector_store %arg12[%c80_48, %c0_49], %56 {strides = array<i32>} : memref<144x384xbf16, #tpu.memory_space<vmem>>, vector<16x384xbf16>,
    %58 = vector.extract_strided_slice %45 {offsets = [0, 145], sizes = [16, 384], strides = [1, 1]} : vector<16x544xbf16> to vector<16x384xbf16>
    %c96_50 = arith.constant 96 : index
    %c0_51 = arith.constant 0 : index
    %59 = vector.load %arg12[%c96_50, %c0_51] : memref<144x384xbf16, #tpu.memory_space<vmem>>, vector<16x384xbf16>
    tpu.vector_store %arg12[%c96_50, %c0_51], %58 {strides = array<i32>} : memref<144x384xbf16, #tpu.memory_space<vmem>>, vector<16x384xbf16>,
    %60 = vector.extract_strided_slice %45 {offsets = [0, 146], sizes = [16, 384], strides = [1, 1]} : vector<16x544xbf16> to vector<16x384xbf16>
    %c112_52 = arith.constant 112 : index
    %c0_53 = arith.constant 0 : index
    %61 = vector.load %arg12[%c112_52, %c0_53] : memref<144x384xbf16, #tpu.memory_space<vmem>>, vector<16x384xbf16>
    tpu.vector_store %arg12[%c112_52, %c0_53], %60 {strides = array<i32>} : memref<144x384xbf16, #tpu.memory_space<vmem>>, vector<16x384xbf16>,
    %62 = vector.extract_strided_slice %45 {offsets = [0, 147], sizes = [16, 384], strides = [1, 1]} : vector<16x544xbf16> to vector<16x384xbf16>
    %c128_54 = arith.constant 128 : index
    %c0_55 = arith.constant 0 : index
    %63 = vector.load %arg12[%c128_54, %c0_55] : memref<144x384xbf16, #tpu.memory_space<vmem>>, vector<16x384xbf16>
    tpu.vector_store %arg12[%c128_54, %c0_55], %62 {strides = array<i32>} : memref<144x384xbf16, #tpu.memory_space<vmem>>, vector<16x384xbf16>,
    %c0_56 = arith.constant 0 : index
    %c0_57 = arith.constant 0 : index
    %64 = vector.load %arg12[%c0_56, %c0_57] : memref<144x384xbf16, #tpu.memory_space<vmem>>, vector<144x384xbf16>
    %cst_58 = arith.constant dense<0.000000e+00> : vector<8x384xf32>
    %65 = tpu.matmul %1, %64, %cst_58 {dimension_numbers = #tpu.dot_dimension_numbers<[1], [0], [0], [1], [0, 0, 1, 1], [], []>} : vector<8x144xbf16>, vector<144x384xbf16>, vector<8x384xf32> -> vector<8x384xf32>
    %66 = vector.broadcast %3 : vector<8x1xf32> to vector<8x384xf32>
    %67 = arith.addf %65, %66 : vector<8x384xf32>
    %cst_59 = arith.constant 0.000000e+00 : f32
    %68 = vector.broadcast %cst_59 : f32 to vector<8x384xf32>
    %69 = arith.maximumf %67, %68 : vector<8x384xf32>
    %c0_60 = arith.constant 0 : index
    %c0_61 = arith.constant 0 : index
    %c0_62 = arith.constant 0 : index
    %70 = vector.load %arg9[%c0_60, %c0_61, %c0_62] : memref<1x8x384xf32, #tpu.memory_space<vmem>>, vector<1x8x384xf32>
    %71 = vector.shape_cast %70 : vector<1x8x384xf32> to vector<8x384xf32>
    %72 = vector.shape_cast %69 : vector<8x384xf32> to vector<1x8x384xf32>
    tpu.vector_store %arg9[%c0_60, %c0_61, %c0_62], %72 {strides = array<i32>} : memref<1x8x384xf32, #tpu.memory_space<vmem>>, vector<1x8x384xf32>,
    return
  }
  func.func @transform_0(%arg0: i32) -> (i32, i32, i32) {
    %c0_i32 = arith.constant 0 : i32
    %c0_i32_0 = arith.constant 0 : i32
    %c0_i32_1 = arith.constant 0 : i32
    return %arg0, %c0_i32, %c0_i32_0 : i32, i32, i32
  }
  func.func @transform_1(%arg0: i32) -> (i32, i32) {
    %c0_i32 = arith.constant 0 : i32
    %c0_i32_0 = arith.constant 0 : i32
    %c0_i32_1 = arith.constant 0 : i32
    return %c0_i32, %c0_i32_0 : i32, i32
  }
  func.func @transform_2(%arg0: i32) -> (i32, i32) {
    %c0_i32 = arith.constant 0 : i32
    %c0_i32_0 = arith.constant 0 : i32
    %c0_i32_1 = arith.constant 0 : i32
    return %c0_i32, %c0_i32_0 : i32, i32
  }
  func.func @transform_3(%arg0: i32) -> (i32, i32) {
    %c0_i32 = arith.constant 0 : i32
    %c0_i32_0 = arith.constant 0 : i32
    %c0_i32_1 = arith.constant 0 : i32
    return %c0_i32, %c0_i32_0 : i32, i32
  }
  func.func @transform_4(%arg0: i32) -> (i32, i32) {
    %c0_i32 = arith.constant 0 : i32
    %c0_i32_0 = arith.constant 0 : i32
    %c0_i32_1 = arith.constant 0 : i32
    return %c0_i32, %c0_i32_0 : i32, i32
  }
  func.func @transform_5(%arg0: i32) -> (i32, i32) {
    %c0_i32 = arith.constant 0 : i32
    %c0_i32_0 = arith.constant 0 : i32
    %c0_i32_1 = arith.constant 0 : i32
    return %c0_i32, %c0_i32_0 : i32, i32
  }
  func.func @transform_6(%arg0: i32) -> (i32, i32) {
    %c0_i32 = arith.constant 0 : i32
    %c0_i32_0 = arith.constant 0 : i32
    %c0_i32_1 = arith.constant 0 : i32
    return %c0_i32, %c0_i32_0 : i32, i32
  }
  func.func @transform_7(%arg0: i32) -> (i32, i32) {
    %c0_i32 = arith.constant 0 : i32
    %c0_i32_0 = arith.constant 0 : i32
    %c0_i32_1 = arith.constant 0 : i32
    return %c0_i32, %c0_i32_0 : i32, i32
  }
  func.func @transform_8(%arg0: i32) -> (i32, i32, i32) {
    %c0_i32 = arith.constant 0 : i32
    %c0_i32_0 = arith.constant 0 : i32
    %c0_i32_1 = arith.constant 0 : i32
    return %arg0, %c0_i32, %c0_i32_0 : i32, i32, i32
  }
}

</mosaic_0001>

<llo_original>
// kernel: diff_forward.1
$region0: #{diff_forward.1}
  #allocation0 [shape = 'u32[]', space=smem, size = 0x4, offset = 0x4, fixed_abs, tag = 'smem constant byte address 0x4 - core index']
  #allocation1 [shape = 'u32[144,128]{1,0:T(1,128)}', space=vmem, size = 0x12000, scoped, tag = 'internal scratch']
  #allocation2 [shape = 'bf16[144,288]{1,0:T(8,128)(2,1)}', space=vmem, size = 0x1b000, scoped, tag = 'scratch operand']
  #allocation3 [shape = 'bf16[16,544]{1,0:T(8,128)(2,1)}', space=vmem, size = 0x5000, scoped, tag = 'scratch operand']
  #allocation4 [shape = 'bf16[144,384]{1,0:T(8,128)(2,1)}', space=vmem, size = 0x1b000, scoped, tag = 'scratch operand']
  %s0 = inlined_call_operand.vmem [shape: bf16[2,16,342], index: 0, kind: input, shape index: {}]
  %s1 = inlined_call_operand.vmem [shape: bf16[16,144], index: 1, kind: input, shape index: {}]
  %s2 = inlined_call_operand.vmem [shape: f32[16,1], index: 2, kind: input, shape index: {}]
  %s3 = inlined_call_operand.vmem [shape: f32[16,1], index: 3, kind: input, shape index: {}]
  %s4 = inlined_call_operand.vmem [shape: f32[16,1], index: 4, kind: input, shape index: {}]
  %s5 = inlined_call_operand.vmem [shape: bf16[8,144], index: 5, kind: input, shape index: {}]
  %s6 = inlined_call_operand.vmem [shape: f32[8,1], index: 6, kind: input, shape index: {}]
  %s7 = inlined_call_operand.vmem [shape: f32[1,288], index: 7, kind: input, shape index: {}]
  %s8 = inlined_call_operand.vmem [shape: f32[2,8,384], index: 8, kind: output, shape index: {}]
  %s9 = sld [smem:[#allocation0]]
  $region65: #{diff_forward.1} parent=0
    _
  %s11 = ssub.s32 1, %s9
  %s12 = scalar_select 0, %s11, %s9
  loop: start=0, step=1, limit=4
  $region2: #{diff_forward.1} parent=0 // loop_pre_header
    _
  $region3: #{diff_forward.1} parent=0 // loop_header
    %s14 = sphi 0, %s18
    %p15 = scmp.ge.s32.totalorder %s14, 4
    %s24 = sphi 0, %s26
    %s27 = sphi 0, %s24
    %s28 = sphi 0, %s27
    %s44 = sphi 0, %s28
    %s48 = sphi 0, %s48
    %s50 = sphi 0, %s48
    %s51 = sphi 0, %s50
    %s65 = sphi 0, %s51
    %s69 = sphi 0, %s69
    %s71 = sphi 0, %s69
    %s72 = sphi 0, %s71
    %s86 = sphi 0, %s72
    %s90 = sphi 0, %s90
    %s92 = sphi 0, %s90
    %s93 = sphi 0, %s92
    %s107 = sphi 0, %s93
    %s111 = sphi 0, %s111
    %s113 = sphi 0, %s111
    %s114 = sphi 0, %s113
    %s128 = sphi 0, %s114
    %s132 = sphi 0, %s132
    %s134 = sphi 0, %s132
    %s135 = sphi 0, %s134
    %s149 = sphi 0, %s135
    %s153 = sphi 0, %s153
    %s155 = sphi 0, %s153
    %s156 = sphi 0, %s155
    %s170 = sphi 0, %s156
    %s174 = sphi 0, %s174
    %s176 = sphi 0, %s174
    %s177 = sphi 0, %s176
    %s191 = sphi 0, %s177
    %s197 = sphi 0, %s199
    %s200 = sphi 0, %s197
    %s201 = sphi 0, %s200
    %s217 = sphi 0, %s201
  $region4: #{diff_forward.1} parent=0 // loop_header_branch
    %17 = sbr.rel (%p15) target = $region8
  $region5: #{diff_forward.1} parent=0 // loop_body
    %s19 = ssub.s32 %s14, 1
    %s20 = ssub.s32 %s14, 2
    %s21 = sadd.s32 %s14, 1
    %s22 = ssub.s32 %s14, %s21
    %p23 = scmp.eq.s32.totalorder %s22, 0
    %s25 = sadd.s32 %s24, 1
    %s26 = scalar_select %p23, %s24, %s25
    %p29 = pneg %p23
    %p30 = scmp.eq.s32.totalorder %s14, 1
    %p31 = por %p29, %p30
    %p32 = scmp.ne.s32.totalorder %s24, %s27
    %p33 = scmp.eq.s32.totalorder %s14, 0
    %p34 = por %p32, %p33
    %p35 = scmp.ne.s32.totalorder %s24, %s27
    %p36 = scmp.eq.s32.totalorder %s19, 1
    %p37 = por %p35, %p36
    %p38 = scmp.ne.s32.totalorder %s27, %s28
    %p39 = scmp.eq.s32.totalorder %s19, 0
    %p40 = por %p38, %p39
    %p41 = scmp.ne.s32.totalorder %s27, %s28
    %p42 = scmp.eq.s32.totalorder %s20, 1
    %p43 = por %p41, %p42
    %p45 = scmp.ne.s32.totalorder %s28, %s44
    %p46 = scmp.eq.s32.totalorder %s20, 0
    %p47 = por %p45, %p46
    %s49 = sadd.s32 %s48, 1
    %p52 = scmp.eq.s32.totalorder %s14, 1
    %p53 = scmp.ne.s32.totalorder %s48, %s50
    %p54 = scmp.eq.s32.totalorder %s14, 0
    %p55 = por %p53, %p54
    %p56 = scmp.ne.s32.totalorder %s48, %s50
    %p57 = scmp.eq.s32.totalorder %s19, 1
    %p58 = por %p56, %p57
    %p59 = scmp.ne.s32.totalorder %s50, %s51
    %p60 = scmp.eq.s32.totalorder %s19, 0
    %p61 = por %p59, %p60
    %p62 = scmp.ne.s32.totalorder %s50, %s51
    %p63 = scmp.eq.s32.totalorder %s20, 1
    %p64 = por %p62, %p63
    %p66 = scmp.ne.s32.totalorder %s51, %s65
    %p67 = scmp.eq.s32.totalorder %s20, 0
    %p68 = por %p66, %p67
    %s70 = sadd.s32 %s69, 1
    %p73 = scmp.eq.s32.totalorder %s14, 1
    %p74 = scmp.ne.s32.totalorder %s69, %s71
    %p75 = scmp.eq.s32.totalorder %s14, 0
    %p76 = por %p74, %p75
    %p77 = scmp.ne.s32.totalorder %s69, %s71
    %p78 = scmp.eq.s32.totalorder %s19, 1
    %p79 = por %p77, %p78
    %p80 = scmp.ne.s32.totalorder %s71, %s72
    %p81 = scmp.eq.s32.totalorder %s19, 0
    %p82 = por %p80, %p81
    %p83 = scmp.ne.s32.totalorder %s71, %s72
    %p84 = scmp.eq.s32.totalorder %s20, 1
    %p85 = por %p83, %p84
    %p87 = scmp.ne.s32.totalorder %s72, %s86
    %p88 = scmp.eq.s32.totalorder %s20, 0
    %p89 = por %p87, %p88
    %s91 = sadd.s32 %s90, 1
    %p94 = scmp.eq.s32.totalorder %s14, 1
    %p95 = scmp.ne.s32.totalorder %s90, %s92
    %p96 = scmp.eq.s32.totalorder %s14, 0
    %p97 = por %p95, %p96
    %p98 = scmp.ne.s32.totalorder %s90, %s92
    %p99 = scmp.eq.s32.totalorder %s19, 1
    %p100 = por %p98, %p99
    %p101 = scmp.ne.s32.totalorder %s92, %s93
    %p102 = scmp.eq.s32.totalorder %s19, 0
    %p103 = por %p101, %p102
    %p104 = scmp.ne.s32.totalorder %s92, %s93
    %p105 = scmp.eq.s32.totalorder %s20, 1
    %p106 = por %p104, %p105
    %p108 = scmp.ne.s32.totalorder %s93, %s107
    %p109 = scmp.eq.s32.totalorder %s20, 0
    %p110 = por %p108, %p109
    %s112 = sadd.s32 %s111, 1
    %p115 = scmp.eq.s32.totalorder %s14, 1
    %p116 = scmp.ne.s32.totalorder %s111, %s113
    %p117 = scmp.eq.s32.totalorder %s14, 0
    %p118 = por %p116, %p117
    %p119 = scmp.ne.s32.totalorder %s111, %s113
    %p120 = scmp.eq.s32.totalorder %s19, 1
    %p121 = por %p119, %p120
    %p122 = scmp.ne.s32.totalorder %s113, %s114
    %p123 = scmp.eq.s32.totalorder %s19, 0
    %p124 = por %p122, %p123
    %p125 = scmp.ne.s32.totalorder %s113, %s114
    %p126 = scmp.eq.s32.totalorder %s20, 1
    %p127 = por %p125, %p126
    %p129 = scmp.ne.s32.totalorder %s114, %s128
    %p130 = scmp.eq.s32.totalorder %s20, 0
    %p131 = por %p129, %p130
    %s133 = sadd.s32 %s132, 1
    %p136 = scmp.eq.s32.totalorder %s14, 1
    %p137 = scmp.ne.s32.totalorder %s132, %s134
    %p138 = scmp.eq.s32.totalorder %s14, 0
    %p139 = por %p137, %p138
    %p140 = scmp.ne.s32.totalorder %s132, %s134
    %p141 = scmp.eq.s32.totalorder %s19, 1
    %p142 = por %p140, %p141
    %p143 = scmp.ne.s32.totalorder %s134, %s135
    %p144 = scmp.eq.s32.totalorder %s19, 0
    %p145 = por %p143, %p144
    %p146 = scmp.ne.s32.totalorder %s134, %s135
    %p147 = scmp.eq.s32.totalorder %s20, 1
    %p148 = por %p146, %p147
    %p150 = scmp.ne.s32.totalorder %s135, %s149
    %p151 = scmp.eq.s32.totalorder %s20, 0
    %p152 = por %p150, %p151
    %s154 = sadd.s32 %s153, 1
    %p157 = scmp.eq.s32.totalorder %s14, 1
    %p158 = scmp.ne.s32.totalorder %s153, %s155
    %p159 = scmp.eq.s32.totalorder %s14, 0
    %p160 = por %p158, %p159
    %p161 = scmp.ne.s32.totalorder %s153, %s155
    %p162 = scmp.eq.s32.totalorder %s19, 1
    %p163 = por %p161, %p162
    %p164 = scmp.ne.s32.totalorder %s155, %s156
    %p165 = scmp.eq.s32.totalorder %s19, 0
    %p166 = por %p164, %p165
    %p167 = scmp.ne.s32.totalorder %s155, %s156
    %p168 = scmp.eq.s32.totalorder %s20, 1
    %p169 = por %p167, %p168
    %p171 = scmp.ne.s32.totalorder %s156, %s170
    %p172 = scmp.eq.s32.totalorder %s20, 0
    %p173 = por %p171, %p172
    %s175 = sadd.s32 %s174, 1
    %p178 = scmp.eq.s32.totalorder %s14, 1
    %p179 = scmp.ne.s32.totalorder %s174, %s176
    %p180 = scmp.eq.s32.totalorder %s14, 0
    %p181 = por %p179, %p180
    %p182 = scmp.ne.s32.totalorder %s174, %s176
    %p183 = scmp.eq.s32.totalorder %s19, 1
    %p184 = por %p182, %p183
    %p185 = scmp.ne.s32.totalorder %s176, %s177
    %p186 = scmp.eq.s32.totalorder %s19, 0
    %p187 = por %p185, %p186
    %p188 = scmp.ne.s32.totalorder %s176, %s177
    %p189 = scmp.eq.s32.totalorder %s20, 1
    %p190 = por %p188, %p189
    %p192 = scmp.ne.s32.totalorder %s177, %s191
    %p193 = scmp.eq.s32.totalorder %s20, 0
    %p194 = por %p192, %p193
    %s195 = ssub.s32 %s14, %s21
    %p196 = scmp.eq.s32.totalorder %s195, 0
    %s198 = sadd.s32 %s197, 1
    %s199 = scalar_select %p196, %s197, %s198
    %p202 = pneg %p196
    %p203 = scmp.eq.s32.totalorder %s14, 1
    %p204 = por %p202, %p203
    %p205 = scmp.ne.s32.totalorder %s197, %s200
    %p206 = scmp.eq.s32.totalorder %s14, 0
    %p207 = por %p205, %p206
    %p208 = scmp.ne.s32.totalorder %s197, %s200
    %p209 = scmp.eq.s32.totalorder %s19, 1
    %p210 = por %p208, %p209
    %p211 = scmp.ne.s32.totalorder %s200, %s201
    %p212 = scmp.eq.s32.totalorder %s19, 0
    %p213 = por %p211, %p212
    %p214 = scmp.ne.s32.totalorder %s200, %s201
    %p215 = scmp.eq.s32.totalorder %s20, 1
    %p216 = por %p214, %p215
    %p218 = scmp.ne.s32.totalorder %s201, %s217
    %p219 = scmp.eq.s32.totalorder %s20, 0
    %p220 = por %p218, %p219
    %p221 = scmp.le.s32.totalorder 1, %s14
    %p222 = scmp.lt.s32.totalorder %s14, 3
    %p223 = pnand %p221, %p222
    %p224 = pneg %p223
    // Predicated region
    $region9: #{diff_forward.1} parent=5 // pred_check
      _
    $region10: #{diff_forward.1} parent=5 // pred_check_branch
      %226 = sbr.rel (%p223) target = $region12
    $region11: #{diff_forward.1} parent=5 // pred_region
      %s227 = ssub.s32 %s14, 1
      // Predicated region
      $region13: #{diff_forward.1} parent=11 // pred_check
        %p228 = pneg %p61
      $region14: #{diff_forward.1} parent=11 // pred_check_branch
        %230 = sbr.rel (%p228) target = $region16
      $region15: #{diff_forward.1} parent=11 // pred_region
        _
      $region16: #{diff_forward.1} parent=11 // pred_fallthru
        _
      // Predicated region
      $region17: #{diff_forward.1} parent=11 // pred_check
        %p231 = pneg %p82
      $region18: #{diff_forward.1} parent=11 // pred_check_branch
        %233 = sbr.rel (%p231) target = $region20
      $region19: #{diff_forward.1} parent=11 // pred_region
        _
      $region20: #{diff_forward.1} parent=11 // pred_fallthru
        _
      // Predicated region
      $region21: #{diff_forward.1} parent=11 // pred_check
        %p234 = pneg %p103
      $region22: #{diff_forward.1} parent=11 // pred_check_branch
        %236 = sbr.rel (%p234) target = $region24
      $region23: #{diff_forward.1} parent=11 // pred_region
        _
      $region24: #{diff_forward.1} parent=11 // pred_fallthru
        _
      // Predicated region
      $region25: #{diff_forward.1} parent=11 // pred_check
        %p237 = pneg %p124
      $region26: #{diff_forward.1} parent=11 // pred_check_branch
        %239 = sbr.rel (%p237) target = $region28
      $region27: #{diff_forward.1} parent=11 // pred_region
        _
      $region28: #{diff_forward.1} parent=11 // pred_fallthru
        _
      // Predicated region
      $region29: #{diff_forward.1} parent=11 // pred_check
        %p240 = pneg %p145
      $region30: #{diff_forward.1} parent=11 // pred_check_branch
        %242 = sbr.rel (%p240) target = $region32
      $region31: #{diff_forward.1} parent=11 // pred_region
        _
      $region32: #{diff_forward.1} parent=11 // pred_fallthru
        _
      // Predicated region
      $region33: #{diff_forward.1} parent=11 // pred_check
        %p243 = pneg %p166
      $region34: #{diff_forward.1} parent=11 // pred_check_branch
        %245 = sbr.rel (%p243) target = $region36
      $region35: #{diff_forward.1} parent=11 // pred_region
        _
      $region36: #{diff_forward.1} parent=11 // pred_fallthru
        _
      // Predicated region
      $region37: #{diff_forward.1} parent=11 // pred_check
        %p246 = pneg %p187
      $region38: #{diff_forward.1} parent=11 // pred_check_branch
        %248 = sbr.rel (%p246) target = $region40
      $region39: #{diff_forward.1} parent=11 // pred_region
        _
      $region40: #{diff_forward.1} parent=11 // pred_fallthru
        _
    $region12: #{diff_forward.1} parent=5 // pred_fallthru
      _
    %p249 = scmp.lt.s32.totalorder %s14, 2
    // Predicated region
    $region41: #{diff_forward.1} parent=5 // pred_check
      %p250 = pneg %p249
    $region42: #{diff_forward.1} parent=5 // pred_check_branch
      %252 = sbr.rel (%p250) target = $region44
    $region43: #{diff_forward.1} parent=5 // pred_region
      // Predicated region
      $region45: #{diff_forward.1} parent=43 // pred_check
        %p253 = pneg %p34
      $region46: #{diff_forward.1} parent=43 // pred_check_branch
        %255 = sbr.rel (%p253) target = $region48
      $region47: #{diff_forward.1} parent=43 // pred_region
        %p256 = scmp.lt.s32.totalorder %s14, 1
        %s257 = scalar_select %p256, %s14, 1
        %s258 = smul.addr %s257, 6
        %s259 = smul.addr %s258, 4
        %s260 = scalar_lea.vmem %s0, %s259
      $region48: #{diff_forward.1} parent=43 // pred_fallthru
        _
    $region44: #{diff_forward.1} parent=5 // pred_fallthru
      _
    %p261 = scmp.le.s32.totalorder 1, %s14
    %p262 = scmp.lt.s32.totalorder %s14, 3
    %p263 = pnand %p261, %p262
    %p264 = pneg %p263
    // Predicated region
    $region49: #{diff_forward.1} parent=5 // pred_check
      _
    $region50: #{diff_forward.1} parent=5 // pred_check_branch
      %266 = sbr.rel (%p263) target = $region52
    $region51: #{diff_forward.1} parent=5 // pred_region
      %s267 = ssub.s32 %s14, 1
      %p268 = scmp.lt.s32.totalorder %s19, 1
      %s269 = scalar_select %p268, %s19, 1
      %s270 = smul.addr %s269, 6
      %s271 = smul.addr %s270, 4
      %s272 = scalar_lea.vmem %s0, %s271
      %p273 = pneg %p40
      %p274 = pneg %p37
      %p275 = pneg %p61
      %p276 = pneg %p58
      %p277 = pneg %p82
      %p278 = pneg %p79
      %p279 = pneg %p103
      %p280 = pneg %p100
      %p281 = pneg %p124
      %p282 = pneg %p121
      %p283 = pneg %p145
      %p284 = pneg %p142
      %p285 = pneg %p166
      %p286 = pneg %p163
      %p287 = pneg %p187
      %p288 = pneg %p184
      %p289 = pneg %p213
      %p290 = pneg %p210
      %p291 = scmp.lt.s32.totalorder %s19, 1
      %s292 = scalar_select %p291, %s19, 1
      %s293 = smul.addr %s292, 3
      %s294 = smul.addr %s293, 8
      %s295 = scalar_lea.vmem %s8, %s294
      %p296 = scmp.lt.s32.totalorder %s19, 1
      %s297 = scalar_select %p296, %s19, 1
      %s298 = smul.addr %s297, 6
      %s299 = smul.addr %s298, 4
      %s300 = scalar_lea.vmem %s0, %s299
      %p301 = scmp.lt.s32.totalorder %s19, 1
      %s302 = scalar_select %p301, %s19, 1
      %s303 = smul.addr %s302, 3
      %s304 = smul.addr %s303, 8
      %s305 = scalar_lea.vmem %s8, %s304
      %v307 = vld [vmem:[%s1] sm:$0xff]
      %v308 = vld [vmem:[%s1 + $0x8] sm:$0xff]
      %v309 = vld [vmem:[%s5] sm:$0xff]
      %v310 = vld [vmem:[%s2] sm:$0xff]
      %v311 = vld [vmem:[%s2 + $0x8] sm:$0xff]
      %v312 = vld [vmem:[%s6] sm:$0xff]
      %v313 = vld [vmem:[%s3] sm:$0xff]
      %v314 = vld [vmem:[%s3 + $0x8] sm:$0xff]
      %v315 = vld [vmem:[%s4] sm:$0xff]
      %v316 = vld [vmem:[%s4 + $0x8] sm:$0xff]
      %v317 = vld [vmem:[%s7] sm:$0x7]
      %318 = vst [vmem:[#allocation3] sm:$0xf] 0
      %319 = vst [vmem:[#allocation3 + $0x14] sm:$0xf] 0
      %vm320 = vcmask 1043712
      %vm321 = vcmask 261124
      %vm322 = vmor %vm321, %vm320
      %323 = vst.msk [vmem:[#allocation3 + $0xc] sm:$0xff] %vm322, 0
      %324 = vst.msk [vmem:[#allocation3 + $0x20] sm:$0xff] %vm322, 0
      %v325 = vld [vmem:[%s300] sm:$0xff]
      %v326 = vld [vmem:[%s300 + $0x8] sm:$0xf]
      %v327 = vld [vmem:[%s300 + $0xc] sm:$0xff]
      %v328 = vld [vmem:[%s300 + $0x14] sm:$0xf]
      %329 = vst [vmem:[#allocation2] sm:$0xff] %v325
      %vm330 = vcmask 257024
      %331 = vst.msk [vmem:[#allocation2 + $0x8] sm:$0xf] %vm330, %v326
      %332 = vst [vmem:[#allocation2 + $0xc] sm:$0xff] %v327
      %333 = vst.msk [vmem:[#allocation2 + $0x14] sm:$0xf] %vm330, %v328
      %338 = vrot.lane.b32.xlu0 %v325, 127
      %v339 = vpop.permute.xlu0 %338
      %340 = vrot.lane.b32.xlu0 %v326, 127
      %v341 = vpop.permute.xlu0 %340
      %342 = vrot.lane.b32.xlu0 %v327, 127
      %v343 = vpop.permute.xlu0 %342
      %344 = vrot.lane.b32.xlu0 %v328, 127
      %v345 = vpop.permute.xlu0 %344
      %v346 = vrot.slane %v339, 4
      %v347 = vrot.slane %v341, 4
      %v348 = vrot.slane %v343, 4
      %v349 = vrot.slane %v345, 4
      %vm350 = vcmask 1043456
      %v351 = vsel %vm350, %v346, %v347
      %vm352 = vcmask 1039360
      %v353 = vsel %vm352, %v339, %v351
      %v354 = vsel %vm350, %v348, %v349
      %v355 = vsel %vm352, %v343, %v354
      %360 = vst [vmem:[#allocation2 + $0x18] sm:$0xff] %v353
      %361 = vst.msk [vmem:[#allocation2 + $0x20] sm:$0xf] %vm330, %v341
      %362 = vst [vmem:[#allocation2 + $0x24] sm:$0xff] %v355
      %363 = vst.msk [vmem:[#allocation2 + $0x2c] sm:$0xf] %vm330, %v345
      %364 = vrot.lane.b32.xlu0 %v325, 126
      %v365 = vpop.permute.xlu0 %364
      %366 = vrot.lane.b32.xlu0 %v326, 126
      %v367 = vpop.permute.xlu0 %366
      %368 = vrot.lane.b32.xlu0 %v327, 126
      %v369 = vpop.permute.xlu0 %368
      %370 = vrot.lane.b32.xlu0 %v328, 126
      %v371 = vpop.permute.xlu0 %370
      %v372 = vrot.slane %v365, 4
      %v373 = vrot.slane %v367, 4
      %v374 = vrot.slane %v369, 4
      %v375 = vrot.slane %v371, 4
      %v376 = vsel %vm350, %v372, %v373
      %vm377 = vcmask 1031168
      %v378 = vsel %vm377, %v365, %v376
      %v379 = vsel %vm350, %v374, %v375
      %v380 = vsel %vm377, %v369, %v379
      %385 = vst [vmem:[#allocation2 + $0x30] sm:$0xff] %v378
      %386 = vst.msk [vmem:[#allocation2 + $0x38] sm:$0xf] %vm330, %v367
      %387 = vst [vmem:[#allocation2 + $0x3c] sm:$0xff] %v380
      %388 = vst.msk [vmem:[#allocation2 + $0x44] sm:$0xf] %vm330, %v371
      %389 = vrot.lane.b32.xlu0 %v325, 110
      %v390 = vpop.permute.xlu0 %389
      %391 = vrot.lane.b32.xlu0 %v326, 110
      %v392 = vpop.permute.xlu0 %391
      %393 = vrot.lane.b32.xlu0 %v327, 110
      %v394 = vpop.permute.xlu0 %393
      %395 = vrot.lane.b32.xlu0 %v328, 110
      %v396 = vpop.permute.xlu0 %395
      %v397 = vrot.slane %v390, 4
      %v398 = vrot.slane %v392, 4
      %v399 = vrot.slane %v394, 4
      %v400 = vrot.slane %v396, 4
      %v401 = vsel %vm350, %v397, %v398
      %vm402 = vcmask 900096
      %v403 = vsel %vm402, %v390, %v401
      %v404 = vsel %vm350, %v399, %v400
      %v405 = vsel %vm402, %v394, %v404
      %410 = vst [vmem:[#allocation2 + $0x48] sm:$0xff] %v403
      %411 = vst.msk [vmem:[#allocation2 + $0x50] sm:$0xf] %vm330, %v392
      %412 = vst [vmem:[#allocation2 + $0x54] sm:$0xff] %v405
      %413 = vst.msk [vmem:[#allocation2 + $0x5c] sm:$0xf] %vm330, %v396
      %414 = vrot.lane.b32.xlu0 %v325, 109
      %v415 = vpop.permute.xlu0 %414
      %416 = vrot.lane.b32.xlu0 %v326, 109
      %v417 = vpop.permute.xlu0 %416
      %418 = vrot.lane.b32.xlu0 %v327, 109
      %v419 = vpop.permute.xlu0 %418
      %420 = vrot.lane.b32.xlu0 %v328, 109
      %v421 = vpop.permute.xlu0 %420
      %v422 = vrot.slane %v415, 4
      %v423 = vrot.slane %v417, 4
      %v424 = vrot.slane %v419, 4
      %v425 = vrot.slane %v421, 4
      %v426 = vsel %vm350, %v422, %v423
      %vm427 = vcmask 891904
      %v428 = vsel %vm427, %v415, %v426
      %v429 = vsel %vm350, %v424, %v425
      %v430 = vsel %vm427, %v419, %v429
      %435 = vst [vmem:[#allocation2 + $0x60] sm:$0xff] %v428
      %436 = vst.msk [vmem:[#allocation2 + $0x68] sm:$0xf] %vm330, %v417
      %437 = vst [vmem:[#allocation2 + $0x6c] sm:$0xff] %v430
      %438 = vst.msk [vmem:[#allocation2 + $0x74] sm:$0xf] %vm330, %v421
      %439 = vrot.lane.b32.xlu0 %v325, 108
      %v440 = vpop.permute.xlu0 %439
      %441 = vrot.lane.b32.xlu0 %v326, 108
      %v442 = vpop.permute.xlu0 %441
      %443 = vrot.lane.b32.xlu0 %v327, 108
      %v444 = vpop.permute.xlu0 %443
      %445 = vrot.lane.b32.xlu0 %v328, 108
      %v446 = vpop.permute.xlu0 %445
      %v447 = vrot.slane %v440, 4
      %v448 = vrot.slane %v442, 4
      %v449 = vrot.slane %v444, 4
      %v450 = vrot.slane %v446, 4
      %v451 = vsel %vm350, %v447, %v448
      %vm452 = vcmask 883712
      %v453 = vsel %vm452, %v440, %v451
      %v454 = vsel %vm350, %v449, %v450
      %v455 = vsel %vm452, %v444, %v454
      %460 = vst [vmem:[#allocation2 + $0x78] sm:$0xff] %v453
      %461 = vst.msk [vmem:[#allocation2 + $0x80] sm:$0xf] %vm330, %v442
      %462 = vst [vmem:[#allocation2 + $0x84] sm:$0xff] %v455
      %463 = vst.msk [vmem:[#allocation2 + $0x8c] sm:$0xf] %vm330, %v446
      %464 = vrot.lane.b32.xlu0 %v325, 92
      %v465 = vpop.permute.xlu0 %464
      %466 = vrot.lane.b32.xlu0 %v326, 92
      %v467 = vpop.permute.xlu0 %466
      %468 = vrot.lane.b32.xlu0 %v327, 92
      %v469 = vpop.permute.xlu0 %468
      %470 = vrot.lane.b32.xlu0 %v328, 92
      %v471 = vpop.permute.xlu0 %470
      %v472 = vrot.slane %v465, 4
      %v473 = vrot.slane %v467, 4
      %v474 = vrot.slane %v469, 4
      %v475 = vrot.slane %v471, 4
      %v476 = vsel %vm350, %v472, %v473
      %vm477 = vcmask 752640
      %v478 = vsel %vm477, %v465, %v476
      %v479 = vsel %vm350, %v474, %v475
      %v480 = vsel %vm477, %v469, %v479
      %485 = vst [vmem:[#allocation2 + $0x90] sm:$0xff] %v478
      %486 = vst.msk [vmem:[#allocation2 + $0x98] sm:$0xf] %vm330, %v467
      %487 = vst [vmem:[#allocation2 + $0x9c] sm:$0xff] %v480
      %488 = vst.msk [vmem:[#allocation2 + $0xa4] sm:$0xf] %vm330, %v471
      %489 = vrot.lane.b32.xlu0 %v325, 91
      %v490 = vpop.permute.xlu0 %489
      %491 = vrot.lane.b32.xlu0 %v326, 91
      %v492 = vpop.permute.xlu0 %491
      %493 = vrot.lane.b32.xlu0 %v327, 91
      %v494 = vpop.permute.xlu0 %493
      %495 = vrot.lane.b32.xlu0 %v328, 91
      %v496 = vpop.permute.xlu0 %495
      %v497 = vrot.slane %v490, 4
      %v498 = vrot.slane %v492, 4
      %v499 = vrot.slane %v494, 4
      %v500 = vrot.slane %v496, 4
      %v501 = vsel %vm350, %v497, %v498
      %vm502 = vcmask 744448
      %v503 = vsel %vm502, %v490, %v501
      %v504 = vsel %vm350, %v499, %v500
      %v505 = vsel %vm502, %v494, %v504
      %510 = vst [vmem:[#allocation2 + $0xa8] sm:$0xff] %v503
      %511 = vst.msk [vmem:[#allocation2 + $0xb0] sm:$0xf] %vm330, %v492
      %512 = vst [vmem:[#allocation2 + $0xb4] sm:$0xff] %v505
      %513 = vst.msk [vmem:[#allocation2 + $0xbc] sm:$0xf] %vm330, %v496
      %514 = vrot.lane.b32.xlu0 %v325, 90
      %v515 = vpop.permute.xlu0 %514
      %516 = vrot.lane.b32.xlu0 %v326, 90
      %v517 = vpop.permute.xlu0 %516
      %518 = vrot.lane.b32.xlu0 %v327, 90
      %v519 = vpop.permute.xlu0 %518
      %520 = vrot.lane.b32.xlu0 %v328, 90
      %v521 = vpop.permute.xlu0 %520
      %v522 = vrot.slane %v515, 4
      %v523 = vrot.slane %v517, 4
      %v524 = vrot.slane %v519, 4
      %v525 = vrot.slane %v521, 4
      %v526 = vsel %vm350, %v522, %v523
      %vm527 = vcmask 736256
      %v528 = vsel %vm527, %v515, %v526
      %v529 = vsel %vm350, %v524, %v525
      %v530 = vsel %vm527, %v519, %v529
      %535 = vst [vmem:[#allocation2 + $0xc0] sm:$0xff] %v528
      %536 = vst.msk [vmem:[#allocation2 + $0xc8] sm:$0xf] %vm330, %v517
      %537 = vst [vmem:[#allocation2 + $0xcc] sm:$0xff] %v530
      %538 = vst.msk [vmem:[#allocation2 + $0xd4] sm:$0xf] %vm330, %v521
      %v539 = vld [vmem:[#allocation2] sm:$0xff]
      %v540 = vld [vmem:[#allocation2 + $0x8] sm:$0xf]
      %v541 = vld [vmem:[#allocation2 + $0xc] sm:$0xff]
      %v542 = vld [vmem:[#allocation2 + $0x14] sm:$0xf]
      %v543 = vld [vmem:[#allocation2 + $0x18] sm:$0xff]
      %v544 = vld [vmem:[#allocation2 + $0x20] sm:$0xf]
      %v545 = vld [vmem:[#allocation2 + $0x24] sm:$0xff]
      %v546 = vld [vmem:[#allocation2 + $0x2c] sm:$0xf]
      %v547 = vld [vmem:[#allocation2 + $0x30] sm:$0xff]
      %v548 = vld [vmem:[#allocation2 + $0x38] sm:$0xf]
      %v549 = vld [vmem:[#allocation2 + $0x3c] sm:$0xff]
      %v550 = vld [vmem:[#allocation2 + $0x44] sm:$0xf]
      %v551 = vld [vmem:[#allocation2 + $0x48] sm:$0xff]
      %v552 = vld [vmem:[#allocation2 + $0x50] sm:$0xf]
      %v553 = vld [vmem:[#allocation2 + $0x54] sm:$0xff]
      %v554 = vld [vmem:[#allocation2 + $0x5c] sm:$0xf]
      %v555 = vld [vmem:[#allocation2 + $0x60] sm:$0xff]
      %v556 = vld [vmem:[#allocation2 + $0x68] sm:$0xf]
      %v557 = vld [vmem:[#allocation2 + $0x6c] sm:$0xff]
      %v558 = vld [vmem:[#allocation2 + $0x74] sm:$0xf]
      %v559 = vld [vmem:[#allocation2 + $0x78] sm:$0xff]
      %v560 = vld [vmem:[#allocation2 + $0x80] sm:$0xf]
      %v561 = vld [vmem:[#allocation2 + $0x84] sm:$0xff]
      %v562 = vld [vmem:[#allocation2 + $0x8c] sm:$0xf]
      %v563 = vld [vmem:[#allocation2 + $0x90] sm:$0xff]
      %v564 = vld [vmem:[#allocation2 + $0x98] sm:$0xf]
      %v565 = vld [vmem:[#allocation2 + $0x9c] sm:$0xff]
      %v566 = vld [vmem:[#allocation2 + $0xa4] sm:$0xf]
      %v567 = vld [vmem:[#allocation2 + $0xa8] sm:$0xff]
      %v568 = vld [vmem:[#allocation2 + $0xb0] sm:$0xf]
      %v569 = vld [vmem:[#allocation2 + $0xb4] sm:$0xff]
      %v570 = vld [vmem:[#allocation2 + $0xbc] sm:$0xf]
      %v571 = vld [vmem:[#allocation2 + $0xc0] sm:$0xff]
      %v572 = vld [vmem:[#allocation2 + $0xc8] sm:$0xf]
      %v573 = vld [vmem:[#allocation2 + $0xcc] sm:$0xff]
      %v574 = vld [vmem:[#allocation2 + $0xd4] sm:$0xf]
      %576 = vset.pattern.permute.xlu0 0
      %577 = vperm.xlu0 %576, %v310
      %v578 = vpop.permute.xlu0 %577
      %581 = vset.pattern.permute.xlu0 0
      %582 = vperm.xlu0 %581, %v311
      %v583 = vpop.permute.xlu0 %582
      %v587 = vunpack.c.l.b16 %v307
      %v588 = vunpack.c.h.b16 %v307
      %v589 = vunpack.c.l.b16 %v308
      %v590 = vunpack.c.h.b16 %v308
      %v591 = vpack.c.b16 %v589, %v587
      %v592 = vpack.c.b16 %v590, %v588
      %v630 = vunpack.c.l.b16 %v539
      %v631 = vunpack.c.h.b16 %v539
      %v632 = vunpack.c.l.b16 %v540
      %v633 = vunpack.c.l.b16 %v541
      %v634 = vunpack.c.h.b16 %v541
      %v635 = vunpack.c.l.b16 %v542
      %v636 = vunpack.c.l.b16 %v543
      %v637 = vunpack.c.h.b16 %v543
      %v638 = vunpack.c.l.b16 %v544
      %v639 = vunpack.c.l.b16 %v545
      %v640 = vunpack.c.h.b16 %v545
      %v641 = vunpack.c.l.b16 %v546
      %v642 = vunpack.c.l.b16 %v547
      %v643 = vunpack.c.h.b16 %v547
      %v644 = vunpack.c.l.b16 %v548
      %v645 = vunpack.c.l.b16 %v549
      %v646 = vunpack.c.h.b16 %v549
      %v647 = vunpack.c.l.b16 %v550
      %v648 = vunpack.c.l.b16 %v551
      %v649 = vunpack.c.h.b16 %v551
      %v650 = vunpack.c.l.b16 %v552
      %v651 = vunpack.c.l.b16 %v553
      %v652 = vunpack.c.h.b16 %v553
      %v653 = vunpack.c.l.b16 %v554
      %v654 = vunpack.c.l.b16 %v555
      %v655 = vunpack.c.h.b16 %v555
      %v656 = vunpack.c.l.b16 %v556
      %v657 = vunpack.c.l.b16 %v557
      %v658 = vunpack.c.h.b16 %v557
      %v659 = vunpack.c.l.b16 %v558
      %v660 = vunpack.c.l.b16 %v559
      %v661 = vunpack.c.h.b16 %v559
      %v662 = vunpack.c.l.b16 %v560
      %v663 = vunpack.c.l.b16 %v561
      %v664 = vunpack.c.h.b16 %v561
      %v665 = vunpack.c.l.b16 %v562
      %v666 = vunpack.c.l.b16 %v563
      %v667 = vunpack.c.h.b16 %v563
      %v668 = vunpack.c.l.b16 %v564
      %v669 = vunpack.c.l.b16 %v565
      %v670 = vunpack.c.h.b16 %v565
      %v671 = vunpack.c.l.b16 %v566
      %v672 = vunpack.c.l.b16 %v567
      %v673 = vunpack.c.h.b16 %v567
      %v674 = vunpack.c.l.b16 %v568
      %v675 = vunpack.c.l.b16 %v569
      %v676 = vunpack.c.h.b16 %v569
      %v677 = vunpack.c.l.b16 %v570
      %v678 = vunpack.c.l.b16 %v571
      %v679 = vunpack.c.h.b16 %v571
      %v680 = vunpack.c.l.b16 %v572
      %v681 = vunpack.c.l.b16 %v573
      %v682 = vunpack.c.h.b16 %v573
      %v683 = vunpack.c.l.b16 %v574
      %v684 = vpack.c.b16 %v633, %v630
      %v685 = vpack.c.b16 %v634, %v631
      %v686 = vpack.c.b16 %v635, %v632
      %v687 = vpack.c.b16 %v639, %v636
      %v688 = vpack.c.b16 %v640, %v637
      %v689 = vpack.c.b16 %v641, %v638
      %v690 = vpack.c.b16 %v645, %v642
      %v691 = vpack.c.b16 %v646, %v643
      %v692 = vpack.c.b16 %v647, %v644
      %v693 = vpack.c.b16 %v651, %v648
      %v694 = vpack.c.b16 %v652, %v649
      %v695 = vpack.c.b16 %v653, %v650
      %v696 = vpack.c.b16 %v657, %v654
      %v697 = vpack.c.b16 %v658, %v655
      %v698 = vpack.c.b16 %v659, %v656
      %v699 = vpack.c.b16 %v663, %v660
      %v700 = vpack.c.b16 %v664, %v661
      %v701 = vpack.c.b16 %v665, %v662
      %v702 = vpack.c.b16 %v669, %v666
      %v703 = vpack.c.b16 %v670, %v667
      %v704 = vpack.c.b16 %v671, %v668
      %v705 = vpack.c.b16 %v675, %v672
      %v706 = vpack.c.b16 %v676, %v673
      %v707 = vpack.c.b16 %v677, %v674
      %v708 = vpack.c.b16 %v681, %v678
      %v709 = vpack.c.b16 %v682, %v679
      %v710 = vpack.c.b16 %v683, %v680
      %vm738 = vcmask 130048
      %v740 = vsel %vm738, %v592, 0
      %742 = vmatprep.subr.bf16.mxu0 %v706
      %743 = vmatpush1.bf16.msra.mxu0 %v705
      %744 = vmatprep.subr.bf16.mxu0 %v703
      %745 = vmatpush1.bf16.msra.mxu0 %v702
      %746 = vmatprep.subr.bf16.mxu0 %v700
      %747 = vmatpush1.bf16.msra.mxu0 %v699
      %748 = vmatprep.subr.bf16.mxu0 %v697
      %749 = vmatpush1.bf16.msra.mxu0 %v696
      %750 = vmatprep.subr.bf16.mxu0 %v694
      %751 = vmatpush1.bf16.msra.mxu0 %v693
      %752 = vmatprep.subr.bf16.mxu0 %v691
      %753 = vmatpush1.bf16.msra.mxu0 %v690
      %754 = vmatprep.subr.bf16.mxu0 %v688
      %755 = vmatpush1.bf16.msra.mxu0 %v687
      %756 = vmatprep.subr.bf16.mxu0 %v685
      %757 = vmatpush1.bf16.msra.mxu0 %v684
      %758 = vmatprep.subr.bf16.mxu0 0
      %759 = vmatpush2.bf16.msra.mxu0 0
      %760 = vmatprep.subr.bf16.mxu0 0
      %761 = vmatpush2.bf16.msra.mxu0 0
      %762 = vmatprep.subr.bf16.mxu0 0
      %763 = vmatpush2.bf16.msra.mxu0 0
      %764 = vmatprep.subr.bf16.mxu0 0
      %765 = vmatpush2.bf16.msra.mxu0 0
      %766 = vmatprep.subr.bf16.mxu0 0
      %767 = vmatpush2.bf16.msra.mxu0 0
      %768 = vmatprep.subr.bf16.mxu0 0
      %769 = vmatpush2.bf16.msra.mxu0 0
      %770 = vmatprep.subr.bf16.mxu0 0
      %771 = vmatpush2.bf16.msra.mxu0 0
      %772 = vmatprep.subr.bf16.mxu0 %v709
      %773 = vmatpush2.bf16.msra.mxu0 %v708
      %774 = vmatprep.mubr.bf16.mxu0 %v740
      %775 = vmatmul.mubr.bf16.gmra.mxu0 %v591
      %v776 = vpop.f32.mrf.mxu0
      %v777 = vadd.f32 %v578, %v776
      %v778 = vpop.f32.mrf.mxu0
      %v779 = vadd.f32 %v578, %v778
      %v780 = vpop.f32.mrf.mxu0
      %v781 = vadd.f32 %v583, %v780
      %v782 = vpop.f32.mrf.mxu0
      %v783 = vadd.f32 %v583, %v782
      %784 = vdwg.mxu0
      %785 = vmatprep.subr.bf16.mxu0 0
      %786 = vmatpush1.bf16.msra.mxu0 %v707
      %787 = vmatprep.subr.bf16.mxu0 0
      %788 = vmatpush1.bf16.msra.mxu0 %v704
      %789 = vmatprep.subr.bf16.mxu0 0
      %790 = vmatpush1.bf16.msra.mxu0 %v701
      %791 = vmatprep.subr.bf16.mxu0 0
      %792 = vmatpush1.bf16.msra.mxu0 %v698
      %793 = vmatprep.subr.bf16.mxu0 0
      %794 = vmatpush1.bf16.msra.mxu0 %v695
      %795 = vmatprep.subr.bf16.mxu0 0
      %796 = vmatpush1.bf16.msra.mxu0 %v692
      %797 = vmatprep.subr.bf16.mxu0 0
      %798 = vmatpush1.bf16.msra.mxu0 %v689
      %799 = vmatprep.subr.bf16.mxu0 0
      %800 = vmatpush1.bf16.msra.mxu0 %v686
      %801 = vmatprep.subr.bf16.mxu0 0
      %802 = vmatpush2.bf16.msra.mxu0 0
      %803 = vmatprep.subr.bf16.mxu0 0
      %804 = vmatpush2.bf16.msra.mxu0 0
      %805 = vmatprep.subr.bf16.mxu0 0
      %806 = vmatpush2.bf16.msra.mxu0 0
      %807 = vmatprep.subr.bf16.mxu0 0
      %808 = vmatpush2.bf16.msra.mxu0 0
      %809 = vmatprep.subr.bf16.mxu0 0
      %810 = vmatpush2.bf16.msra.mxu0 0
      %811 = vmatprep.subr.bf16.mxu0 0
      %812 = vmatpush2.bf16.msra.mxu0 0
      %813 = vmatprep.subr.bf16.mxu0 0
      %814 = vmatpush2.bf16.msra.mxu0 0
      %815 = vmatprep.subr.bf16.mxu0 0
      %816 = vmatpush2.bf16.msra.mxu0 %v710
      %817 = vmatprep.mubr.bf16.mxu0 %v740
      %818 = vmatmul.mubr.bf16.gmra.mxu0 %v591
      %v819 = vpop.f32.mrf.mxu0
      %v820 = vadd.f32 %v578, %v819
      %v821 = vpop.f32.mrf.mxu0
      %v822 = vpop.f32.mrf.mxu0
      %v823 = vadd.f32 %v583, %v822
      %v824 = vpop.f32.mrf.mxu0
      %825 = vdwg.mxu0
      %v826 = vmax.f32 %v777, 0.0
      %v827 = vmax.f32 %v779, 0.0
      %v828 = vmax.f32 %v820, 0.0
      %v829 = vmax.f32 %v781, 0.0
      %v830 = vmax.f32 %v783, 0.0
      %v831 = vmax.f32 %v823, 0.0
      %833 = vset.pattern.permute.xlu0 0
      %834 = vperm.xlu0 %833, %v313
      %v835 = vpop.permute.xlu0 %834
      %838 = vset.pattern.permute.xlu0 0
      %839 = vperm.xlu0 %838, %v314
      %v840 = vpop.permute.xlu0 %839
      %v842 = vmul.f32 %v826, %v835
      %v843 = vmul.f32 %v827, %v835
      %v844 = vmul.f32 %v828, %v835
      %v845 = vmul.f32 %v829, %v840
      %v846 = vmul.f32 %v830, %v840
      %v847 = vmul.f32 %v831, %v840
      %849 = vset.pattern.permute.xlu0 0
      %850 = vperm.xlu0 %849, %v315
      %v851 = vpop.permute.xlu0 %850
      %854 = vset.pattern.permute.xlu0 0
      %855 = vperm.xlu0 %854, %v316
      %v856 = vpop.permute.xlu0 %855
      %v858 = vadd.f32 %v842, %v851
      %v859 = vadd.f32 %v843, %v851
      %v860 = vadd.f32 %v844, %v851
      %v861 = vadd.f32 %v845, %v856
      %v862 = vadd.f32 %v846, %v856
      %v863 = vadd.f32 %v847, %v856
      %v865 = vlaneseq
      %v866 = vshrl.u32 %v865, 7
      %v867 = vsub.s32 0, %v866
      %v868 = vrot.slane %v317, %v867
      %v869 = vlaneseq
      %v870 = vshrl.u32 %v869, 7
      %v871 = vsub.s32 1, %v870
      %v872 = vrot.slane %v317, %v871
      %v873 = vlaneseq
      %v874 = vshrl.u32 %v873, 7
      %v875 = vsub.s32 2, %v874
      %v876 = vrot.slane %v317, %v875
      %v880 = vmul.f32 %v858, %v868
      %v881 = vmul.f32 %v859, %v872
      %v882 = vmul.f32 %v860, %v876
      %v883 = vmul.f32 %v861, %v868
      %v884 = vmul.f32 %v862, %v872
      %v885 = vmul.f32 %v863, %v876
      %v886 = vpack.c.bf16 %v883, %v880
      %v887 = vpack.c.bf16 %v884, %v881
      %v888 = vpack.c.bf16 %v885, %v882
      %v892 = vunpack.c.l.b16 %v886
      %v893 = vunpack.c.l.b16 %v887
      %v894 = vunpack.c.l.b16 %v888
      %v895 = vunpack.c.h.b16 %v886
      %v896 = vunpack.c.h.b16 %v887
      %v897 = vunpack.c.h.b16 %v888
      %v898 = vpack.c.b16 %v893, %v892
      %v899 = vpack.c.b16 %v894, %v894
      %v900 = vpack.c.b16 %v896, %v895
      %v901 = vpack.c.b16 %v897, %v897
      %906 = vst [vmem:[#allocation3 + $0x4] sm:$0xff] %v898
      %907 = vst.msk [vmem:[#allocation3 + $0xc] sm:$0xf] %vm330, %v899
      %908 = vst [vmem:[#allocation3 + $0x18] sm:$0xff] %v900
      %909 = vst.msk [vmem:[#allocation3 + $0x20] sm:$0xf] %vm330, %v901
      %v910 = vld [vmem:[#allocation3] sm:$0xff]
      %v911 = vld [vmem:[#allocation3 + $0x8] sm:$0xff]
      %v912 = vld [vmem:[#allocation3 + $0x10] sm:$0xf]
      %v913 = vld [vmem:[#allocation3 + $0x14] sm:$0xff]
      %v914 = vld [vmem:[#allocation3 + $0x1c] sm:$0xff]
      %v915 = vld [vmem:[#allocation3 + $0x24] sm:$0xf]
      %920 = vrot.lane.b32.xlu0 %v910, 19
      %v921 = vpop.permute.xlu0 %920
      %922 = vrot.lane.b32.xlu0 %v911, 19
      %v923 = vpop.permute.xlu0 %922
      %924 = vrot.lane.b32.xlu0 %v913, 19
      %v925 = vpop.permute.xlu0 %924
      %926 = vrot.lane.b32.xlu0 %v914, 19
      %v927 = vpop.permute.xlu0 %926
      %v928 = vrot.slane %v921, 4
      %v929 = vrot.slane %v923, 4
      %v930 = vrot.slane %v925, 4
      %v931 = vrot.slane %v927, 4
      %v932 = vsel %vm350, %v928, %v929
      %vm933 = vcmask 154624
      %v934 = vsel %vm933, %v921, %v932
      %v935 = vsel %vm933, %v923, %v929
      %v936 = vsel %vm350, %v930, %v931
      %v937 = vsel %vm933, %v925, %v936
      %v938 = vsel %vm933, %v927, %v931
      %943 = vst [vmem:[#allocation4] sm:$0xff] %v934
      %944 = vst [vmem:[#allocation4 + $0x8] sm:$0xf] %v935
      %945 = vst [vmem:[#allocation4 + $0xc] sm:$0xff] %v937
      %946 = vst [vmem:[#allocation4 + $0x14] sm:$0xf] %v938
      %947 = vrot.lane.b32.xlu0 %v910, 18
      %v948 = vpop.permute.xlu0 %947
      %949 = vrot.lane.b32.xlu0 %v911, 18
      %v950 = vpop.permute.xlu0 %949
      %951 = vrot.lane.b32.xlu0 %v913, 18
      %v952 = vpop.permute.xlu0 %951
      %953 = vrot.lane.b32.xlu0 %v914, 18
      %v954 = vpop.permute.xlu0 %953
      %v955 = vrot.slane %v948, 4
      %v956 = vrot.slane %v950, 4
      %v957 = vrot.slane %v952, 4
      %v958 = vrot.slane %v954, 4
      %v959 = vsel %vm350, %v955, %v956
      %vm960 = vcmask 146432
      %v961 = vsel %vm960, %v948, %v959
      %v962 = vsel %vm960, %v950, %v956
      %v963 = vsel %vm350, %v957, %v958
      %v964 = vsel %vm960, %v952, %v963
      %v965 = vsel %vm960, %v954, %v958
      %970 = vst [vmem:[#allocation4 + $0x18] sm:$0xff] %v961
      %971 = vst [vmem:[#allocation4 + $0x20] sm:$0xf] %v962
      %972 = vst [vmem:[#allocation4 + $0x24] sm:$0xff] %v964
      %973 = vst [vmem:[#allocation4 + $0x2c] sm:$0xf] %v965
      %974 = vrot.lane.b32.xlu0 %v910, 17
      %v975 = vpop.permute.xlu0 %974
      %976 = vrot.lane.b32.xlu0 %v911, 17
      %v977 = vpop.permute.xlu0 %976
      %978 = vrot.lane.b32.xlu0 %v913, 17
      %v979 = vpop.permute.xlu0 %978
      %980 = vrot.lane.b32.xlu0 %v914, 17
      %v981 = vpop.permute.xlu0 %980
      %v982 = vrot.slane %v975, 4
      %v983 = vrot.slane %v977, 4
      %v984 = vrot.slane %v979, 4
      %v985 = vrot.slane %v981, 4
      %v986 = vsel %vm350, %v982, %v983
      %vm987 = vcmask 138240
      %v988 = vsel %vm987, %v975, %v986
      %v989 = vsel %vm987, %v977, %v983
      %v990 = vsel %vm350, %v984, %v985
      %v991 = vsel %vm987, %v979, %v990
      %v992 = vsel %vm987, %v981, %v985
      %997 = vst [vmem:[#allocation4 + $0x30] sm:$0xff] %v988
      %998 = vst [vmem:[#allocation4 + $0x38] sm:$0xf] %v989
      %999 = vst [vmem:[#allocation4 + $0x3c] sm:$0xff] %v991
      %1000 = vst [vmem:[#allocation4 + $0x44] sm:$0xf] %v992
      %1001 = vrot.lane.b32.xlu0 %v910, 1
      %v1002 = vpop.permute.xlu0 %1001
      %1003 = vrot.lane.b32.xlu0 %v911, 1
      %v1004 = vpop.permute.xlu0 %1003
      %1005 = vrot.lane.b32.xlu0 %v913, 1
      %v1006 = vpop.permute.xlu0 %1005
      %1007 = vrot.lane.b32.xlu0 %v914, 1
      %v1008 = vpop.permute.xlu0 %1007
      %v1009 = vrot.slane %v1002, 4
      %v1010 = vrot.slane %v1004, 4
      %v1011 = vrot.slane %v1006, 4
      %v1012 = vrot.slane %v1008, 4
      %v1013 = vsel %vm350, %v1009, %v1010
      %vm1014 = vcmask 7168
      %v1015 = vsel %vm1014, %v1002, %v1013
      %v1016 = vsel %vm1014, %v1004, %v1010
      %v1017 = vsel %vm350, %v1011, %v1012
      %v1018 = vsel %vm1014, %v1006, %v1017
      %v1019 = vsel %vm1014, %v1008, %v1012
      %1024 = vst [vmem:[#allocation4 + $0x48] sm:$0xff] %v1015
      %1025 = vst [vmem:[#allocation4 + $0x50] sm:$0xf] %v1016
      %1026 = vst [vmem:[#allocation4 + $0x54] sm:$0xff] %v1018
      %1027 = vst [vmem:[#allocation4 + $0x5c] sm:$0xf] %v1019
      %v1028 = vrot.slane %v910, 4
      %v1029 = vrot.slane %v911, 4
      %v1030 = vrot.slane %v913, 4
      %v1031 = vrot.slane %v914, 4
      %v1032 = vsel %vm350, %v1028, %v1029
      %v1033 = vsel %vm350, %v1030, %v1031
      %1038 = vst [vmem:[#allocation4 + $0x60] sm:$0xff] %v1032
      %1039 = vst [vmem:[#allocation4 + $0x68] sm:$0xf] %v1029
      %1040 = vst [vmem:[#allocation4 + $0x6c] sm:$0xff] %v1033
      %1041 = vst [vmem:[#allocation4 + $0x74] sm:$0xf] %v1031
      %1044 = vrot.lane.b32.xlu0 %v910, 127
      %v1045 = vpop.permute.xlu0 %1044
      %1046 = vrot.lane.b32.xlu0 %v911, 127
      %v1047 = vpop.permute.xlu0 %1046
      %1048 = vrot.lane.b32.xlu0 %v912, 127
      %v1049 = vpop.permute.xlu0 %1048
      %1050 = vrot.lane.b32.xlu0 %v913, 127
      %v1051 = vpop.permute.xlu0 %1050
      %1052 = vrot.lane.b32.xlu0 %v914, 127
      %v1053 = vpop.permute.xlu0 %1052
      %1054 = vrot.lane.b32.xlu0 %v915, 127
      %v1055 = vpop.permute.xlu0 %1054
      %v1056 = vrot.slane %v1045, 4
      %v1057 = vrot.slane %v1047, 4
      %v1058 = vrot.slane %v1051, 4
      %v1059 = vrot.slane %v1053, 4
      %v1060 = vsel %vm350, %v1056, %v1057
      %v1061 = vsel %vm352, %v1060, %v1047
      %v1062 = vsel %vm352, %v1057, %v1049
      %v1063 = vsel %vm350, %v1058, %v1059
      %v1064 = vsel %vm352, %v1063, %v1053
      %v1065 = vsel %vm352, %v1059, %v1055
      %1070 = vst [vmem:[#allocation4 + $0x78] sm:$0xff] %v1061
      %1071 = vst [vmem:[#allocation4 + $0x80] sm:$0xf] %v1062
      %1072 = vst [vmem:[#allocation4 + $0x84] sm:$0xff] %v1064
      %1073 = vst [vmem:[#allocation4 + $0x8c] sm:$0xf] %v1065
      %1074 = vrot.lane.b32.xlu0 %v910, 111
      %v1075 = vpop.permute.xlu0 %1074
      %1076 = vrot.lane.b32.xlu0 %v911, 111
      %v1077 = vpop.permute.xlu0 %1076
      %1078 = vrot.lane.b32.xlu0 %v912, 111
      %v1079 = vpop.permute.xlu0 %1078
      %1080 = vrot.lane.b32.xlu0 %v913, 111
      %v1081 = vpop.permute.xlu0 %1080
      %1082 = vrot.lane.b32.xlu0 %v914, 111
      %v1083 = vpop.permute.xlu0 %1082
      %1084 = vrot.lane.b32.xlu0 %v915, 111
      %v1085 = vpop.permute.xlu0 %1084
      %v1086 = vrot.slane %v1075, 4
      %v1087 = vrot.slane %v1077, 4
      %v1088 = vrot.slane %v1081, 4
      %v1089 = vrot.slane %v1083, 4
      %v1090 = vsel %vm350, %v1086, %v1087
      %vm1091 = vcmask 908288
      %v1092 = vsel %vm1091, %v1090, %v1077
      %v1093 = vsel %vm1091, %v1087, %v1079
      %v1094 = vsel %vm350, %v1088, %v1089
      %v1095 = vsel %vm1091, %v1094, %v1083
      %v1096 = vsel %vm1091, %v1089, %v1085
      %1101 = vst [vmem:[#allocation4 + $0x90] sm:$0xff] %v1092
      %1102 = vst [vmem:[#allocation4 + $0x98] sm:$0xf] %v1093
      %1103 = vst [vmem:[#allocation4 + $0x9c] sm:$0xff] %v1095
      %1104 = vst [vmem:[#allocation4 + $0xa4] sm:$0xf] %v1096
      %1105 = vrot.lane.b32.xlu0 %v910, 110
      %v1106 = vpop.permute.xlu0 %1105
      %1107 = vrot.lane.b32.xlu0 %v911, 110
      %v1108 = vpop.permute.xlu0 %1107
      %1109 = vrot.lane.b32.xlu0 %v912, 110
      %v1110 = vpop.permute.xlu0 %1109
      %1111 = vrot.lane.b32.xlu0 %v913, 110
      %v1112 = vpop.permute.xlu0 %1111
      %1113 = vrot.lane.b32.xlu0 %v914, 110
      %v1114 = vpop.permute.xlu0 %1113
      %1115 = vrot.lane.b32.xlu0 %v915, 110
      %v1116 = vpop.permute.xlu0 %1115
      %v1117 = vrot.slane %v1106, 4
      %v1118 = vrot.slane %v1108, 4
      %v1119 = vrot.slane %v1112, 4
      %v1120 = vrot.slane %v1114, 4
      %v1121 = vsel %vm350, %v1117, %v1118
      %v1122 = vsel %vm402, %v1121, %v1108
      %v1123 = vsel %vm402, %v1118, %v1110
      %v1124 = vsel %vm350, %v1119, %v1120
      %v1125 = vsel %vm402, %v1124, %v1114
      %v1126 = vsel %vm402, %v1120, %v1116
      %1131 = vst [vmem:[#allocation4 + $0xa8] sm:$0xff] %v1122
      %1132 = vst [vmem:[#allocation4 + $0xb0] sm:$0xf] %v1123
      %1133 = vst [vmem:[#allocation4 + $0xb4] sm:$0xff] %v1125
      %1134 = vst [vmem:[#allocation4 + $0xbc] sm:$0xf] %v1126
      %1135 = vrot.lane.b32.xlu0 %v910, 109
      %v1136 = vpop.permute.xlu0 %1135
      %1137 = vrot.lane.b32.xlu0 %v911, 109
      %v1138 = vpop.permute.xlu0 %1137
      %1139 = vrot.lane.b32.xlu0 %v912, 109
      %v1140 = vpop.permute.xlu0 %1139
      %1141 = vrot.lane.b32.xlu0 %v913, 109
      %v1142 = vpop.permute.xlu0 %1141
      %1143 = vrot.lane.b32.xlu0 %v914, 109
      %v1144 = vpop.permute.xlu0 %1143
      %1145 = vrot.lane.b32.xlu0 %v915, 109
      %v1146 = vpop.permute.xlu0 %1145
      %v1147 = vrot.slane %v1136, 4
      %v1148 = vrot.slane %v1138, 4
      %v1149 = vrot.slane %v1142, 4
      %v1150 = vrot.slane %v1144, 4
      %v1151 = vsel %vm350, %v1147, %v1148
      %v1152 = vsel %vm427, %v1151, %v1138
      %v1153 = vsel %vm427, %v1148, %v1140
      %v1154 = vsel %vm350, %v1149, %v1150
      %v1155 = vsel %vm427, %v1154, %v1144
      %v1156 = vsel %vm427, %v1150, %v1146
      %1161 = vst [vmem:[#allocation4 + $0xc0] sm:$0xff] %v1152
      %1162 = vst [vmem:[#allocation4 + $0xc8] sm:$0xf] %v1153
      %1163 = vst [vmem:[#allocation4 + $0xcc] sm:$0xff] %v1155
      %1164 = vst [vmem:[#allocation4 + $0xd4] sm:$0xf] %v1156
      %v1165 = vld [vmem:[#allocation4] sm:$0xff]
      %v1166 = vld [vmem:[#allocation4 + $0x8] sm:$0xf]
      %v1167 = vld [vmem:[#allocation4 + $0xc] sm:$0xff]
      %v1168 = vld [vmem:[#allocation4 + $0x14] sm:$0xf]
      %v1169 = vld [vmem:[#allocation4 + $0x18] sm:$0xff]
      %v1170 = vld [vmem:[#allocation4 + $0x20] sm:$0xf]
      %v1171 = vld [vmem:[#allocation4 + $0x24] sm:$0xff]
      %v1172 = vld [vmem:[#allocation4 + $0x2c] sm:$0xf]
      %v1173 = vld [vmem:[#allocation4 + $0x30] sm:$0xff]
      %v1174 = vld [vmem:[#allocation4 + $0x38] sm:$0xf]
      %v1175 = vld [vmem:[#allocation4 + $0x3c] sm:$0xff]
      %v1176 = vld [vmem:[#allocation4 + $0x44] sm:$0xf]
      %v1177 = vld [vmem:[#allocation4 + $0x48] sm:$0xff]
      %v1178 = vld [vmem:[#allocation4 + $0x50] sm:$0xf]
      %v1179 = vld [vmem:[#allocation4 + $0x54] sm:$0xff]
      %v1180 = vld [vmem:[#allocation4 + $0x5c] sm:$0xf]
      %v1181 = vld [vmem:[#allocation4 + $0x60] sm:$0xff]
      %v1182 = vld [vmem:[#allocation4 + $0x68] sm:$0xf]
      %v1183 = vld [vmem:[#allocation4 + $0x6c] sm:$0xff]
      %v1184 = vld [vmem:[#allocation4 + $0x74] sm:$0xf]
      %v1185 = vld [vmem:[#allocation4 + $0x78] sm:$0xff]
      %v1186 = vld [vmem:[#allocation4 + $0x80] sm:$0xf]
      %v1187 = vld [vmem:[#allocation4 + $0x84] sm:$0xff]
      %v1188 = vld [vmem:[#allocation4 + $0x8c] sm:$0xf]
      %v1189 = vld [vmem:[#allocation4 + $0x90] sm:$0xff]
      %v1190 = vld [vmem:[#allocation4 + $0x98] sm:$0xf]
      %v1191 = vld [vmem:[#allocation4 + $0x9c] sm:$0xff]
      %v1192 = vld [vmem:[#allocation4 + $0xa4] sm:$0xf]
      %v1193 = vld [vmem:[#allocation4 + $0xa8] sm:$0xff]
      %v1194 = vld [vmem:[#allocation4 + $0xb0] sm:$0xf]
      %v1195 = vld [vmem:[#allocation4 + $0xb4] sm:$0xff]
      %v1196 = vld [vmem:[#allocation4 + $0xbc] sm:$0xf]
      %v1197 = vld [vmem:[#allocation4 + $0xc0] sm:$0xff]
      %v1198 = vld [vmem:[#allocation4 + $0xc8] sm:$0xf]
      %v1199 = vld [vmem:[#allocation4 + $0xcc] sm:$0xff]
      %v1200 = vld [vmem:[#allocation4 + $0xd4] sm:$0xf]
      %1202 = vset.pattern.permute.xlu0 0
      %1203 = vperm.xlu0 %1202, %v312
      %v1204 = vpop.permute.xlu0 %1203
      %v1207 = vunpack.c.l.b16 %v309
      %v1208 = vunpack.c.h.b16 %v309
      %v1209 = vpack.c.b16 %v1207, %v1207
      %v1210 = vpack.c.b16 %v1208, %v1208
      %v1248 = vunpack.c.l.b16 %v1165
      %v1249 = vunpack.c.h.b16 %v1165
      %v1250 = vunpack.c.l.b16 %v1166
      %v1251 = vunpack.c.l.b16 %v1167
      %v1252 = vunpack.c.h.b16 %v1167
      %v1253 = vunpack.c.l.b16 %v1168
      %v1254 = vunpack.c.l.b16 %v1169
      %v1255 = vunpack.c.h.b16 %v1169
      %v1256 = vunpack.c.l.b16 %v1170
      %v1257 = vunpack.c.l.b16 %v1171
      %v1258 = vunpack.c.h.b16 %v1171
      %v1259 = vunpack.c.l.b16 %v1172
      %v1260 = vunpack.c.l.b16 %v1173
      %v1261 = vunpack.c.h.b16 %v1173
      %v1262 = vunpack.c.l.b16 %v1174
      %v1263 = vunpack.c.l.b16 %v1175
      %v1264 = vunpack.c.h.b16 %v1175
      %v1265 = vunpack.c.l.b16 %v1176
      %v1266 = vunpack.c.l.b16 %v1177
      %v1267 = vunpack.c.h.b16 %v1177
      %v1268 = vunpack.c.l.b16 %v1178
      %v1269 = vunpack.c.l.b16 %v1179
      %v1270 = vunpack.c.h.b16 %v1179
      %v1271 = vunpack.c.l.b16 %v1180
      %v1272 = vunpack.c.l.b16 %v1181
      %v1273 = vunpack.c.h.b16 %v1181
      %v1274 = vunpack.c.l.b16 %v1182
      %v1275 = vunpack.c.l.b16 %v1183
      %v1276 = vunpack.c.h.b16 %v1183
      %v1277 = vunpack.c.l.b16 %v1184
      %v1278 = vunpack.c.l.b16 %v1185
      %v1279 = vunpack.c.h.b16 %v1185
      %v1280 = vunpack.c.l.b16 %v1186
      %v1281 = vunpack.c.l.b16 %v1187
      %v1282 = vunpack.c.h.b16 %v1187
      %v1283 = vunpack.c.l.b16 %v1188
      %v1284 = vunpack.c.l.b16 %v1189
      %v1285 = vunpack.c.h.b16 %v1189
      %v1286 = vunpack.c.l.b16 %v1190
      %v1287 = vunpack.c.l.b16 %v1191
      %v1288 = vunpack.c.h.b16 %v1191
      %v1289 = vunpack.c.l.b16 %v1192
      %v1290 = vunpack.c.l.b16 %v1193
      %v1291 = vunpack.c.h.b16 %v1193
      %v1292 = vunpack.c.l.b16 %v1194
      %v1293 = vunpack.c.l.b16 %v1195
      %v1294 = vunpack.c.h.b16 %v1195
      %v1295 = vunpack.c.l.b16 %v1196
      %v1296 = vunpack.c.l.b16 %v1197
      %v1297 = vunpack.c.h.b16 %v1197
      %v1298 = vunpack.c.l.b16 %v1198
      %v1299 = vunpack.c.l.b16 %v1199
      %v1300 = vunpack.c.h.b16 %v1199
      %v1301 = vunpack.c.l.b16 %v1200
      %v1302 = vpack.c.b16 %v1251, %v1248
      %v1303 = vpack.c.b16 %v1252, %v1249
      %v1304 = vpack.c.b16 %v1253, %v1250
      %v1305 = vpack.c.b16 %v1257, %v1254
      %v1306 = vpack.c.b16 %v1258, %v1255
      %v1307 = vpack.c.b16 %v1259, %v1256
      %v1308 = vpack.c.b16 %v1263, %v1260
      %v1309 = vpack.c.b16 %v1264, %v1261
      %v1310 = vpack.c.b16 %v1265, %v1262
      %v1311 = vpack.c.b16 %v1269, %v1266
      %v1312 = vpack.c.b16 %v1270, %v1267
      %v1313 = vpack.c.b16 %v1271, %v1268
      %v1314 = vpack.c.b16 %v1275, %v1272
      %v1315 = vpack.c.b16 %v1276, %v1273
      %v1316 = vpack.c.b16 %v1277, %v1274
      %v1317 = vpack.c.b16 %v1281, %v1278
      %v1318 = vpack.c.b16 %v1282, %v1279
      %v1319 = vpack.c.b16 %v1283, %v1280
      %v1320 = vpack.c.b16 %v1287, %v1284
      %v1321 = vpack.c.b16 %v1288, %v1285
      %v1322 = vpack.c.b16 %v1289, %v1286
      %v1323 = vpack.c.b16 %v1293, %v1290
      %v1324 = vpack.c.b16 %v1294, %v1291
      %v1325 = vpack.c.b16 %v1295, %v1292
      %v1326 = vpack.c.b16 %v1299, %v1296
      %v1327 = vpack.c.b16 %v1300, %v1297
      %v1328 = vpack.c.b16 %v1301, %v1298
      %v1357 = vsel %vm738, %v1210, 0
      %1359 = vmatprep.subr.bf16.mxu0 %v1324
      %1360 = vmatpush1.bf16.msra.mxu0 %v1323
      %1361 = vmatprep.subr.bf16.mxu0 %v1321
      %1362 = vmatpush1.bf16.msra.mxu0 %v1320
      %1363 = vmatprep.subr.bf16.mxu0 %v1318
      %1364 = vmatpush1.bf16.msra.mxu0 %v1317
      %1365 = vmatprep.subr.bf16.mxu0 %v1315
      %1366 = vmatpush1.bf16.msra.mxu0 %v1314
      %1367 = vmatprep.subr.bf16.mxu0 %v1312
      %1368 = vmatpush1.bf16.msra.mxu0 %v1311
      %1369 = vmatprep.subr.bf16.mxu0 %v1309
      %1370 = vmatpush1.bf16.msra.mxu0 %v1308
      %1371 = vmatprep.subr.bf16.mxu0 %v1306
      %1372 = vmatpush1.bf16.msra.mxu0 %v1305
      %1373 = vmatprep.subr.bf16.mxu0 %v1303
      %1374 = vmatpush1.bf16.msra.mxu0 %v1302
      %1375 = vmatprep.subr.bf16.mxu0 0
      %1376 = vmatpush2.bf16.msra.mxu0 0
      %1377 = vmatprep.subr.bf16.mxu0 0
      %1378 = vmatpush2.bf16.msra.mxu0 0
      %1379 = vmatprep.subr.bf16.mxu0 0
      %1380 = vmatpush2.bf16.msra.mxu0 0
      %1381 = vmatprep.subr.bf16.mxu0 0
      %1382 = vmatpush2.bf16.msra.mxu0 0
      %1383 = vmatprep.subr.bf16.mxu0 0
      %1384 = vmatpush2.bf16.msra.mxu0 0
      %1385 = vmatprep.subr.bf16.mxu0 0
      %1386 = vmatpush2.bf16.msra.mxu0 0
      %1387 = vmatprep.subr.bf16.mxu0 0
      %1388 = vmatpush2.bf16.msra.mxu0 0
      %1389 = vmatprep.subr.bf16.mxu0 %v1327
      %1390 = vmatpush2.bf16.msra.mxu0 %v1326
      %1391 = vmatprep.mubr.bf16.mxu0 %v1357
      %1392 = vmatmul.mubr.bf16.gmra.mxu0 %v1209
      %v1393 = vpop.f32.mrf.mxu0
      %v1394 = vadd.f32 %v1204, %v1393
      %v1395 = vpop.f32.mrf.mxu0
      %v1396 = vadd.f32 %v1204, %v1395
      %v1397 = vpop.f32.mrf.mxu0
      %v1398 = vpop.f32.mrf.mxu0
      %1399 = vdwg.mxu0
      %1400 = vmatprep.subr.bf16.mxu0 0
      %1401 = vmatpush1.bf16.msra.mxu0 %v1325
      %1402 = vmatprep.subr.bf16.mxu0 0
      %1403 = vmatpush1.bf16.msra.mxu0 %v1322
      %1404 = vmatprep.subr.bf16.mxu0 0
      %1405 = vmatpush1.bf16.msra.mxu0 %v1319
      %1406 = vmatprep.subr.bf16.mxu0 0
      %1407 = vmatpush1.bf16.msra.mxu0 %v1316
      %1408 = vmatprep.subr.bf16.mxu0 0
      %1409 = vmatpush1.bf16.msra.mxu0 %v1313
      %1410 = vmatprep.subr.bf16.mxu0 0
      %1411 = vmatpush1.bf16.msra.mxu0 %v1310
      %1412 = vmatprep.subr.bf16.mxu0 0
      %1413 = vmatpush1.bf16.msra.mxu0 %v1307
      %1414 = vmatprep.subr.bf16.mxu0 0
      %1415 = vmatpush1.bf16.msra.mxu0 %v1304
      %1416 = vmatprep.subr.bf16.mxu0 0
      %1417 = vmatpush2.bf16.msra.mxu0 0
      %1418 = vmatprep.subr.bf16.mxu0 0
      %1419 = vmatpush2.bf16.msra.mxu0 0
      %1420 = vmatprep.subr.bf16.mxu0 0
      %1421 = vmatpush2.bf16.msra.mxu0 0
      %1422 = vmatprep.subr.bf16.mxu0 0
      %1423 = vmatpush2.bf16.msra.mxu0 0
      %1424 = vmatprep.subr.bf16.mxu0 0
      %1425 = vmatpush2.bf16.msra.mxu0 0
      %1426 = vmatprep.subr.bf16.mxu0 0
      %1427 = vmatpush2.bf16.msra.mxu0 0
      %1428 = vmatprep.subr.bf16.mxu0 0
      %1429 = vmatpush2.bf16.msra.mxu0 0
      %1430 = vmatprep.subr.bf16.mxu0 0
      %1431 = vmatpush2.bf16.msra.mxu0 %v1328
      %1432 = vmatprep.mubr.bf16.mxu0 %v1357
      %1433 = vmatmul.mubr.bf16.gmra.mxu0 %v1209
      %v1434 = vpop.f32.mrf.mxu0
      %v1435 = vadd.f32 %v1204, %v1434
      %v1436 = vpop.f32.mrf.mxu0
      %v1437 = vpop.f32.mrf.mxu0
      %v1438 = vpop.f32.mrf.mxu0
      %1439 = vdwg.mxu0
      %v1440 = vmax.f32 %v1394, 0.0
      %v1441 = vmax.f32 %v1396, 0.0
      %v1442 = vmax.f32 %v1435, 0.0
      %1443 = vst [vmem:[%s305] sm:$0xff] %v1440
      %1444 = vst [vmem:[%s305 + $0x8] sm:$0xff] %v1441
      %1445 = vst [vmem:[%s305 + $0x10] sm:$0xff] %v1442
      %p1446 = scmp.lt.s32.totalorder %s19, 1
      %s1447 = scalar_select %p1446, %s19, 1
      %s1448 = smul.addr %s1447, 3
      %s1449 = smul.addr %s1448, 8
      %s1450 = scalar_lea.vmem %s8, %s1449
      // Predicated region
      $region53: #{diff_forward.1} parent=51 // pred_check
        %p1451 = pneg %p210
      $region54: #{diff_forward.1} parent=51 // pred_check_branch
        %1453 = sbr.rel (%p1451) target = $region56
      $region55: #{diff_forward.1} parent=51 // pred_region
        _
      $region56: #{diff_forward.1} parent=51 // pred_fallthru
        _
    $region52: #{diff_forward.1} parent=5 // pred_fallthru
      _
    %p1454 = scmp.le.s32.totalorder 2, %s14
    // Predicated region
    $region57: #{diff_forward.1} parent=5 // pred_check
      %p1455 = pneg %p1454
    $region58: #{diff_forward.1} parent=5 // pred_check_branch
      %1457 = sbr.rel (%p1455) target = $region60
    $region59: #{diff_forward.1} parent=5 // pred_region
      %s1458 = ssub.s32 %s14, 2
      // Predicated region
      $region61: #{diff_forward.1} parent=59 // pred_check
        %p1459 = pneg %p216
      $region62: #{diff_forward.1} parent=59 // pred_check_branch
        %1461 = sbr.rel (%p1459) target = $region64
      $region63: #{diff_forward.1} parent=59 // pred_region
        %p1462 = scmp.lt.s32.totalorder %s20, 1
        %s1463 = scalar_select %p1462, %s20, 1
        %s1464 = smul.addr %s1463, 3
        %s1465 = smul.addr %s1464, 8
        %s1466 = scalar_lea.vmem %s8, %s1465
      $region64: #{diff_forward.1} parent=59 // pred_fallthru
        _
    $region60: #{diff_forward.1} parent=5 // pred_fallthru
      _
  $region6: #{diff_forward.1} parent=0 // loop_footer
    %s18 = sadd.s32 1, %s14
  $region7: #{diff_forward.1} parent=0 // loop_footer_branch
    %13 = sbr.rel target = $region3
  $region8: #{diff_forward.1} parent=0 // loop_exit
    _

</llo_original>
